<compile_context>
chip_gen: v7x
topology: tpu7x:2x2x1
jax: 0.10.0
libtpu: 0.0.40
codegen_flags: <defaults>
</compile_context>

<pallas_src>
import math
from functools import partial

import jax
import jax.numpy as jnp
from jax import lax
from jax.experimental import pallas as pl
from jax.experimental.pallas import tpu as pltpu

_LN_EPS = 1e-5


def _layer_norm(x2d, gamma, beta):
    # x2d: (R, E) f32; gamma/beta: (1, E)
    mean = jnp.mean(x2d, axis=-1, keepdims=True)
    xc = x2d - mean
    var = jnp.mean(xc * xc, axis=-1, keepdims=True)
    return xc * lax.rsqrt(var + _LN_EPS) * gamma + beta


def _encoder_block_kernel(x_ref, wqkv_ref, wproj_ref, wfc1_ref, wfc2_ref,
                          vecs_ref, bfc1_ref, o_ref, *, n_heads, head_dim):
    blk = pl.program_id(1)

    # o_ref's block index is constant along the block axis, so it stays resident
    # in VMEM across all blocks of this batch element: use it as the residual
    # stream.  Initialize it from the input at the first block.
    @pl.when(blk == 0)
    def _():
        o_ref[...] = x_ref[...]

    _, S, E = o_ref.shape
    H, Hd = n_heads, head_dim

    x2d = o_ref[...].reshape(S, E)                        # (S, E) f32

    # Packed per-block vectors: rows = [b_proj, g1, beta1, b_fc2, g2, beta2, 0, 0]
    vecs = vecs_ref[0]                                    # (8, E)
    b_proj = vecs[0:1, :]
    g1, beta1 = vecs[1:2, :], vecs[2:3, :]
    b_fc2 = vecs[3:4, :]
    g2, beta2 = vecs[4:5, :], vecs[5:6, :]
    b_fc1 = bfc1_ref[0]                                   # (1, 4E)

    # ---- multi-head attention: heads batched on the leading dim ------------
    # Static Ref slices of the stacked weights (free, no activation slicing).
    wq = wqkv_ref[0, 0:H]                                 # (H, E, Hd), sqrt(Hd) folded in
    wk = wqkv_ref[0, H:2 * H]
    wv = wqkv_ref[0, 2 * H:3 * H]
    xh = jnp.broadcast_to(x2d[None, :, :], (H, S, E))     # (H, S, E)

    dn = (((2,), (1,)), ((0,), (0,)))                     # 'bse,bed->bsd'
    q = lax.dot_general(xh, wq, dn, preferred_element_type=jnp.float32)   # (H, S, Hd)
    k = lax.dot_general(xh, wk, dn, preferred_element_type=jnp.float32)
    v = lax.dot_general(xh, wv, dn, preferred_element_type=jnp.float32)

    scores = lax.dot_general(q, k, (((2,), (2,)), ((0,), (0,))),
                             preferred_element_type=jnp.float32)          # (H, S, S)
    m = jnp.max(scores, axis=-1, keepdims=True)
    p = jnp.exp(scores - m)
    denom = jnp.sum(p, axis=-1, keepdims=True)
    r = pl.reciprocal(denom, approx=True)                 # EUP slot
    r = r * (2.0 - denom * r)                             # one Newton step -> f32 parity
    ctx = lax.dot_general(p * r, v, dn,
                          preferred_element_type=jnp.float32)             # (H, S, Hd)

    # Output projection: sum_h ctx_h @ WpT_h  ==  concat(heads) @ Wp^T.
    proj_h = lax.dot_general(ctx, wproj_ref[0], dn,
                             preferred_element_type=jnp.float32)          # (H, S, E)
    proj = jnp.sum(proj_h, axis=0) + b_proj                               # (S, E)

    y = _layer_norm(x2d + proj, g1, beta1)

    # ---- FeedForward + residual + LayerNorm 2 -------------------------------
    h1 = jnp.dot(y, wfc1_ref[0], preferred_element_type=jnp.float32) + b_fc1
    h1 = jnp.maximum(h1, 0.0)
    ff = jnp.dot(h1, wfc2_ref[0], preferred_element_type=jnp.float32) + b_fc2
    z = _layer_norm(y + ff, g2, beta2)

    o_ref[...] = z.reshape(1, S, E)


def encoder_forward(x, block_params, *, n_heads, head_dim):
    """x: (B, S, E) f32. block_params: list of per-block dicts in PyTorch layout."""
    B, S, E = x.shape
    n_blocks = len(block_params)
    H, Hd = n_heads, head_dim
    NHD = H * Hd
    scale = float(head_dim) ** 0.5   # reference MULTIPLIES (not divides) by this

    def stack(fn):
        return jnp.stack([fn(bp) for bp in block_params], axis=0)

    # Stacked per-head weights (H, E, Hd); scale folded into Q.  Packed (3H, E, Hd).
    def pack_qkv(bp):
        wq = jnp.stack([w.T * scale for (w, _, _) in bp["heads"]], axis=0)
        wk = jnp.stack([w.T for (_, w, _) in bp["heads"]], axis=0)
        wv = jnp.stack([w.T for (_, _, w) in bp["heads"]], axis=0)
        return jnp.concatenate([wq, wk, wv], axis=0)

    w_qkv = stack(pack_qkv)                                        # (nb, 3H, E, Hd)
    w_projT = stack(lambda bp: bp["w_proj"].T.reshape(H, Hd, E))   # (nb, H, Hd, E)
    w_fc1 = stack(lambda bp: bp["w_fc1"].T)                        # (nb, E, 4E)
    w_fc2 = stack(lambda bp: bp["w_fc2"].T)                        # (nb, 4E, E)

    def pack_vecs(bp):                                             # (8, E)
        zero = jnp.zeros((E,), jnp.float32)
        return jnp.stack([bp["b_proj"], bp["g1"], bp["beta1"],
                          bp["b_fc2"], bp["g2"], bp["beta2"], zero, zero], axis=0)

    vecs = stack(pack_vecs)                                        # (nb, 8, E)
    b_fc1 = stack(lambda bp: bp["b_fc1"].reshape(1, 4 * E))        # (nb, 1, 4E)

    kernel = partial(_encoder_block_kernel, n_heads=H, head_dim=Hd)

    def per_block(shape):
        return pl.BlockSpec((1,) + shape, lambda b, l: (l,) + (0,) * len(shape))

    def per_batch(shape):
        return pl.BlockSpec((1,) + shape, lambda b, l: (b,) + (0,) * len(shape))

    # Explicit VMEM budget from actual tile sizes (double-buffered weight stream
    # + activations + slack); clamped below the v7x 64 MiB physical capacity.
    itemsize = 4
    weight_bytes = (3 * NHD * E + NHD * E + 8 * E * E + 8 * E + 4 * E) * itemsize
    act_bytes = (2 * S * E + H * S * (2 * E + 3 * Hd + 2 * S) + S * 4 * E) * itemsize
    vmem_budget = int(min(max(3 * (2 * weight_bytes + act_bytes), 16 * 2**20),
                          56 * 2**20))

    return pl.pallas_call(
        kernel,
        out_shape=jax.ShapeDtypeStruct((B, S, E), x.dtype),
        grid_spec=pltpu.PrefetchScalarGridSpec(
            num_scalar_prefetch=0,
            grid=(B, n_blocks),                 # batch parallel, blocks sequential
            in_specs=[
                per_batch((S, E)),              # x (fetched once per batch row)
                per_block((3 * H, E, Hd)),      # stacked QKV weights (Q pre-scaled)
                per_block((H, Hd, E)),          # output projection, head-major
                per_block((E, 4 * E)),          # fc1 weight
                per_block((4 * E, E)),          # fc2 weight
                per_block((8, E)),              # packed small vectors
                per_block((1, 4 * E)),          # fc1 bias
            ],
            out_specs=per_batch((S, E)),        # doubles as the resident residual stream
        ),
        compiler_params=pltpu.CompilerParams(
            dimension_semantics=("parallel", "arbitrary"),
            vmem_limit_bytes=vmem_budget,
        ),
    )(x, w_qkv, w_projT, w_fc1, w_fc2, vecs, b_fc1)


# ----------------------------- pure-JAX reference -----------------------------

def _layer_norm_ref(x, g, b, eps=_LN_EPS):
    mean = jnp.mean(x, axis=-1, keepdims=True)
    var = jnp.mean((x - mean) ** 2, axis=-1, keepdims=True)
    return (x - mean) / jnp.sqrt(var + eps) * g + b


def reference_encoder(x, block_params):
    """Mirrors the PyTorch Encoder forward exactly (per-head Linears, multiply-scale)."""
    for bp in block_params:
        head_outs = []
        for (wq, wk, wv) in bp["heads"]:
            v = x @ wv.T
            k = x @ wk.T
            q = x @ wq.T
            w = (q @ jnp.swapaxes(k, -2, -1)) * (k.shape[-1] ** 0.5)
            w = jax.nn.softmax(w, axis=-1)
            head_outs.append(w @ v)
        mha = jnp.concatenate(head_outs, axis=-1) @ bp["w_proj"].T + bp["b_proj"]
        x = _layer_norm_ref(x + mha, bp["g1"], bp["beta1"])
        ff = jax.nn.relu(x @ bp["w_fc1"].T + bp["b_fc1"]) @ bp["w_fc2"].T + bp["b_fc2"]
        x = _layer_norm_ref(x + ff, bp["g2"], bp["beta2"])
    return x


def init_params(key, n_blocks, n_heads, embed_dim, head_dim):
    params = []
    for _ in range(n_blocks):
        heads = []
        bound = 1.0 / math.sqrt(embed_dim)
        for _ in range(n_heads):
            key, k1, k2, k3 = jax.random.split(key, 4)
            wq = jax.random.uniform(k1, (head_dim, embed_dim), minval=-bound, maxval=bound, dtype=jnp.float32)
            wk = jax.random.uniform(k2, (head_dim, embed_dim), minval=-bound, maxval=bound, dtype=jnp.float32)
            wv = jax.random.uniform(k3, (head_dim, embed_dim), minval=-bound, maxval=bound, dtype=jnp.float32)
            heads.append((wq, wk, wv))
        key, kp, kbp, kf1, kbf1, kf2, kbf2, kg1, kb1, kg2, kb2 = jax.random.split(key, 11)
        nhd = n_heads * head_dim
        bp_ = 1.0 / math.sqrt(nhd)
        b1_ = 1.0 / math.sqrt(embed_dim)
        b2_ = 1.0 / math.sqrt(4 * embed_dim)
        params.append(dict(
            heads=heads,
            w_proj=jax.random.uniform(kp, (embed_dim, nhd), minval=-bp_, maxval=bp_, dtype=jnp.float32),
            b_proj=jax.random.uniform(kbp, (embed_dim,), minval=-bp_, maxval=bp_, dtype=jnp.float32),
            w_fc1=jax.random.uniform(kf1, (4 * embed_dim, embed_dim), minval=-b1_, maxval=b1_, dtype=jnp.float32),
            b_fc1=jax.random.uniform(kbf1, (4 * embed_dim,), minval=-b1_, maxval=b1_, dtype=jnp.float32),
            w_fc2=jax.random.uniform(kf2, (embed_dim, 4 * embed_dim), minval=-b2_, maxval=b2_, dtype=jnp.float32),
            b_fc2=jax.random.uniform(kbf2, (embed_dim,), minval=-b2_, maxval=b2_, dtype=jnp.float32),
            # randomized LN affine params so the test actually exercises gamma/beta
            g1=1.0 + 0.1 * jax.random.normal(kg1, (embed_dim,), dtype=jnp.float32),
            beta1=0.1 * jax.random.normal(kb1, (embed_dim,), dtype=jnp.float32),
            g2=1.0 + 0.1 * jax.random.normal(kg2, (embed_dim,), dtype=jnp.float32),
            beta2=0.1 * jax.random.normal(kb2, (embed_dim,), dtype=jnp.float32),
        ))
    return params


if __name__ == "__main__":
    # Small shapes consistent with the module.
    B, S, E = 2, 8, 32
    n_heads, head_dim, n_blocks = 4, 16, 2

    key = jax.random.PRNGKey(0)
    key, kx = jax.random.split(key)
    x = jax.random.normal(kx, (B, S, E), dtype=jnp.float32)
    params = init_params(key, n_blocks, n_heads, E, head_dim)

    out = encoder_forward(x, params, n_heads=n_heads, head_dim=head_dim)
    out = jax.block_until_ready(out)

    ref = reference_encoder(x, params)
    assert out.shape == (B, S, E), out.shape
    max_err = jnp.max(jnp.abs(out - ref))
    assert jnp.allclose(out, ref, atol=1e-4, rtol=1e-4), f"max abs err = {max_err}"

    print("KERNEL_OK")
</pallas_src>

<mosaic_0001>
module attributes {stable_mosaic.version = 11 : i64} {
  func.func @_encoder_block_kernel(%arg0: i32, %arg1: i32, %arg2: memref<1x8x32xf32, #tpu.memory_space<vmem>>, %arg3: memref<1x12x32x16xf32, #tpu.memory_space<vmem>>, %arg4: memref<1x4x16x32xf32, #tpu.memory_space<vmem>>, %arg5: memref<1x32x128xf32, #tpu.memory_space<vmem>>, %arg6: memref<1x128x32xf32, #tpu.memory_space<vmem>>, %arg7: memref<1x8x32xf32, #tpu.memory_space<vmem>>, %arg8: memref<1x1x128xf32, #tpu.memory_space<vmem>>, %arg9: memref<1x8x32xf32, #tpu.memory_space<vmem>>) attributes {dimension_semantics = [#tpu.dimension_semantics<parallel>, #tpu.dimension_semantics<arbitrary>], iteration_bounds = array<i64: 2, 2>, scalar_prefetch = 0 : i64, scratch_operands = 0 : i64, tpu.core_type = #tpu.core_type<tc>, window_params = [{transform_indices = @transform_0, window_bounds = array<i64: 1, 8, 32>}, {transform_indices = @transform_1, window_bounds = array<i64: 1, 12, 32, 16>}, {transform_indices = @transform_2, window_bounds = array<i64: 1, 4, 16, 32>}, {transform_indices = @transform_3, window_bounds = array<i64: 1, 32, 128>}, {transform_indices = @transform_4, window_bounds = array<i64: 1, 128, 32>}, {transform_indices = @transform_5, window_bounds = array<i64: 1, 8, 32>}, {transform_indices = @transform_6, window_bounds = array<i64: 1, 1, 128>}, {transform_indices = @transform_7, window_bounds = array<i64: 1, 8, 32>}]} {
    %c0_i32 = arith.constant 0 : i32
    %0 = arith.cmpi eq, %arg1, %c0_i32 : i32
    %1 = arith.extui %0 : i1 to i32
    %c0_i32_0 = arith.constant 0 : i32
    %2 = arith.cmpi ne, %1, %c0_i32_0 : i32
    scf.if %2 {
      %c0_54 = arith.constant 0 : index
      %c0_55 = arith.constant 0 : index
      %c0_56 = arith.constant 0 : index
      %105 = vector.load %arg2[%c0_54, %c0_55, %c0_56] : memref<1x8x32xf32, #tpu.memory_space<vmem>>, vector<1x8x32xf32>
      %c0_57 = arith.constant 0 : index
      %c0_58 = arith.constant 0 : index
      %c0_59 = arith.constant 0 : index
      %106 = vector.load %arg9[%c0_57, %c0_58, %c0_59] : memref<1x8x32xf32, #tpu.memory_space<vmem>>, vector<1x8x32xf32>
      tpu.vector_store %arg9[%c0_57, %c0_58, %c0_59], %105 {strides = array<i32>} : memref<1x8x32xf32, #tpu.memory_space<vmem>>, vector<1x8x32xf32>,
    } else {
    }
    %c0 = arith.constant 0 : index
    %c0_1 = arith.constant 0 : index
    %c0_2 = arith.constant 0 : index
    %3 = vector.load %arg9[%c0, %c0_1, %c0_2] : memref<1x8x32xf32, #tpu.memory_space<vmem>>, vector<1x8x32xf32>
    %4 = vector.shape_cast %3 : vector<1x8x32xf32> to vector<8x32xf32>
    %c0_3 = arith.constant 0 : index
    %c0_4 = arith.constant 0 : index
    %c0_5 = arith.constant 0 : index
    %5 = vector.load %arg7[%c0_3, %c0_4, %c0_5] : memref<1x8x32xf32, #tpu.memory_space<vmem>>, vector<1x8x32xf32>
    %6 = vector.shape_cast %5 : vector<1x8x32xf32> to vector<8x32xf32>
    %7 = vector.extract_strided_slice %6 {offsets = [0, 0], sizes = [1, 32], strides = [1, 1]} : vector<8x32xf32> to vector<1x32xf32>
    %8 = vector.extract_strided_slice %6 {offsets = [1, 0], sizes = [1, 32], strides = [1, 1]} : vector<8x32xf32> to vector<1x32xf32>
    %9 = vector.extract_strided_slice %6 {offsets = [2, 0], sizes = [1, 32], strides = [1, 1]} : vector<8x32xf32> to vector<1x32xf32>
    %10 = vector.extract_strided_slice %6 {offsets = [3, 0], sizes = [1, 32], strides = [1, 1]} : vector<8x32xf32> to vector<1x32xf32>
    %11 = vector.extract_strided_slice %6 {offsets = [4, 0], sizes = [1, 32], strides = [1, 1]} : vector<8x32xf32> to vector<1x32xf32>
    %12 = vector.extract_strided_slice %6 {offsets = [5, 0], sizes = [1, 32], strides = [1, 1]} : vector<8x32xf32> to vector<1x32xf32>
    %c0_6 = arith.constant 0 : index
    %c0_7 = arith.constant 0 : index
    %c0_8 = arith.constant 0 : index
    %13 = vector.load %arg8[%c0_6, %c0_7, %c0_8] : memref<1x1x128xf32, #tpu.memory_space<vmem>>, vector<1x1x128xf32>
    %14 = vector.shape_cast %13 : vector<1x1x128xf32> to vector<1x128xf32>
    %c0_9 = arith.constant 0 : index
    %c0_10 = arith.constant 0 : index
    %c0_11 = arith.constant 0 : index
    %c0_12 = arith.constant 0 : index
    %15 = vector.load %arg3[%c0_9, %c0_10, %c0_11, %c0_12] : memref<1x12x32x16xf32, #tpu.memory_space<vmem>>, vector<1x4x32x16xf32>
    %16 = vector.shape_cast %15 : vector<1x4x32x16xf32> to vector<4x32x16xf32>
    %c0_13 = arith.constant 0 : index
    %c4 = arith.constant 4 : index
    %c0_14 = arith.constant 0 : index
    %c0_15 = arith.constant 0 : index
    %17 = vector.load %arg3[%c0_13, %c4, %c0_14, %c0_15] : memref<1x12x32x16xf32, #tpu.memory_space<vmem>>, vector<1x4x32x16xf32>
    %18 = vector.shape_cast %17 : vector<1x4x32x16xf32> to vector<4x32x16xf32>
    %c0_16 = arith.constant 0 : index
    %c8 = arith.constant 8 : index
    %c0_17 = arith.constant 0 : index
    %c0_18 = arith.constant 0 : index
    %19 = vector.load %arg3[%c0_16, %c8, %c0_17, %c0_18] : memref<1x12x32x16xf32, #tpu.memory_space<vmem>>, vector<1x4x32x16xf32>
    %20 = vector.shape_cast %19 : vector<1x4x32x16xf32> to vector<4x32x16xf32>
    %21 = vector.shape_cast %4 : vector<8x32xf32> to vector<1x8x32xf32>
    %22 = vector.shape_cast %21 : vector<1x8x32xf32> to vector<1x8x32xf32>
    %23 = vector.broadcast %22 : vector<1x8x32xf32> to vector<4x8x32xf32>
    %cst = arith.constant dense<0.000000e+00> : vector<4x8x16xf32>
    %24 = tpu.matmul %23, %16, %cst {dimension_numbers = #tpu.dot_dimension_numbers<[2], [1], [1], [2], [0, 0, 0, 1, 1, 2], [0], [0]>} : vector<4x8x32xf32>, vector<4x32x16xf32>, vector<4x8x16xf32> -> vector<4x8x16xf32>
    %cst_19 = arith.constant dense<0.000000e+00> : vector<4x8x16xf32>
    %25 = tpu.matmul %23, %18, %cst_19 {dimension_numbers = #tpu.dot_dimension_numbers<[2], [1], [1], [2], [0, 0, 0, 1, 1, 2], [0], [0]>} : vector<4x8x32xf32>, vector<4x32x16xf32>, vector<4x8x16xf32> -> vector<4x8x16xf32>
    %cst_20 = arith.constant dense<0.000000e+00> : vector<4x8x16xf32>
    %26 = tpu.matmul %23, %20, %cst_20 {dimension_numbers = #tpu.dot_dimension_numbers<[2], [1], [1], [2], [0, 0, 0, 1, 1, 2], [0], [0]>} : vector<4x8x32xf32>, vector<4x32x16xf32>, vector<4x8x16xf32> -> vector<4x8x16xf32>
    %cst_21 = arith.constant dense<0.000000e+00> : vector<4x8x8xf32>
    %27 = tpu.matmul %24, %25, %cst_21 {dimension_numbers = #tpu.dot_dimension_numbers<[2], [2], [1], [1], [0, 0, 0, 1, 1, 1], [0], [0]>} : vector<4x8x16xf32>, vector<4x8x16xf32>, vector<4x8x8xf32> -> vector<4x8x8xf32>
    %cst_22 = arith.constant dense<0xFF800000> : vector<4x8xf32>
    %28 = vector.multi_reduction <maximumf>, %27, %cst_22 [2] : vector<4x8x8xf32> to vector<4x8xf32>
    %29 = vector.shape_cast %28 : vector<4x8xf32> to vector<4x8x1xf32>
    %30 = vector.broadcast %29 : vector<4x8x1xf32> to vector<4x8x8xf32>
    %31 = arith.subf %27, %30 : vector<4x8x8xf32>
    %32 = math.exp %31 : vector<4x8x8xf32>
    %cst_23 = arith.constant dense<0.000000e+00> : vector<4x8xf32>
    %33 = vector.multi_reduction <add>, %32, %cst_23 [2] : vector<4x8x8xf32> to vector<4x8xf32>
    %34 = vector.shape_cast %33 : vector<4x8xf32> to vector<4x8x1xf32>
    %35 = tpu.reciprocal %34 {approx = true} : vector<4x8x1xf32> -> vector<4x8x1xf32>
    %36 = arith.mulf %34, %35 : vector<4x8x1xf32>
    %cst_24 = arith.constant 2.000000e+00 : f32
    %37 = vector.broadcast %cst_24 : f32 to vector<4x8x1xf32>
    %38 = arith.subf %37, %36 : vector<4x8x1xf32>
    %39 = arith.mulf %35, %38 : vector<4x8x1xf32>
    %40 = vector.broadcast %39 : vector<4x8x1xf32> to vector<4x8x8xf32>
    %41 = arith.mulf %32, %40 : vector<4x8x8xf32>
    %cst_25 = arith.constant dense<0.000000e+00> : vector<4x8x16xf32>
    %42 = tpu.matmul %41, %26, %cst_25 {dimension_numbers = #tpu.dot_dimension_numbers<[2], [1], [1], [2], [0, 0, 0, 1, 1, 2], [0], [0]>} : vector<4x8x8xf32>, vector<4x8x16xf32>, vector<4x8x16xf32> -> vector<4x8x16xf32>
    %c0_26 = arith.constant 0 : index
    %c0_27 = arith.constant 0 : index
    %c0_28 = arith.constant 0 : index
    %c0_29 = arith.constant 0 : index
    %43 = vector.load %arg4[%c0_26, %c0_27, %c0_28, %c0_29] : memref<1x4x16x32xf32, #tpu.memory_space<vmem>>, vector<1x4x16x32xf32>
    %44 = vector.shape_cast %43 : vector<1x4x16x32xf32> to vector<4x16x32xf32>
    %cst_30 = arith.constant dense<0.000000e+00> : vector<4x8x32xf32>
    %45 = tpu.matmul %42, %44, %cst_30 {dimension_numbers = #tpu.dot_dimension_numbers<[2], [1], [1], [2], [0, 0, 0, 1, 1, 2], [0], [0]>} : vector<4x8x16xf32>, vector<4x16x32xf32>, vector<4x8x32xf32> -> vector<4x8x32xf32>
    %cst_31 = arith.constant dense<0.000000e+00> : vector<8x32xf32>
    %46 = vector.multi_reduction <add>, %45, %cst_31 [0] : vector<4x8x32xf32> to vector<8x32xf32>
    %47 = vector.broadcast %7 : vector<1x32xf32> to vector<8x32xf32>
    %48 = arith.addf %46, %47 : vector<8x32xf32>
    %49 = arith.addf %4, %48 : vector<8x32xf32>
    %cst_32 = arith.constant dense<0.000000e+00> : vector<8xf32>
    %50 = vector.multi_reduction <add>, %49, %cst_32 [1] : vector<8x32xf32> to vector<8xf32>
    %51 = vector.shape_cast %50 : vector<8xf32> to vector<8x1xf32>
    %cst_33 = arith.constant 3.200000e+01 : f32
    %52 = vector.broadcast %cst_33 : f32 to vector<8x1xf32>
    %53 = arith.divf %51, %52 : vector<8x1xf32>
    %54 = vector.broadcast %53 : vector<8x1xf32> to vector<8x32xf32>
    %55 = arith.subf %49, %54 : vector<8x32xf32>
    %56 = arith.mulf %55, %55 : vector<8x32xf32>
    %cst_34 = arith.constant dense<0.000000e+00> : vector<8xf32>
    %57 = vector.multi_reduction <add>, %56, %cst_34 [1] : vector<8x32xf32> to vector<8xf32>
    %58 = vector.shape_cast %57 : vector<8xf32> to vector<8x1xf32>
    %cst_35 = arith.constant 3.200000e+01 : f32
    %59 = vector.broadcast %cst_35 : f32 to vector<8x1xf32>
    %60 = arith.divf %58, %59 : vector<8x1xf32>
    %cst_36 = arith.constant 9.99999974E-6 : f32
    %61 = vector.broadcast %cst_36 : f32 to vector<8x1xf32>
    %62 = arith.addf %60, %61 : vector<8x1xf32>
    %63 = math.rsqrt %62 : vector<8x1xf32>
    %64 = vector.broadcast %63 : vector<8x1xf32> to vector<8x32xf32>
    %65 = arith.mulf %55, %64 : vector<8x32xf32>
    %66 = vector.broadcast %8 : vector<1x32xf32> to vector<8x32xf32>
    %67 = arith.mulf %65, %66 : vector<8x32xf32>
    %68 = vector.broadcast %9 : vector<1x32xf32> to vector<8x32xf32>
    %69 = arith.addf %67, %68 : vector<8x32xf32>
    %c0_37 = arith.constant 0 : index
    %c0_38 = arith.constant 0 : index
    %c0_39 = arith.constant 0 : index
    %70 = vector.load %arg5[%c0_37, %c0_38, %c0_39] : memref<1x32x128xf32, #tpu.memory_space<vmem>>, vector<1x32x128xf32>
    %71 = vector.shape_cast %70 : vector<1x32x128xf32> to vector<32x128xf32>
    %cst_40 = arith.constant dense<0.000000e+00> : vector<8x128xf32>
    %72 = tpu.matmul %69, %71, %cst_40 {dimension_numbers = #tpu.dot_dimension_numbers<[1], [0], [0], [1], [0, 0, 1, 1], [], []>} : vector<8x32xf32>, vector<32x128xf32>, vector<8x128xf32> -> vector<8x128xf32>
    %73 = vector.broadcast %14 : vector<1x128xf32> to vector<8x128xf32>
    %74 = arith.addf %72, %73 : vector<8x128xf32>
    %cst_41 = arith.constant 0.000000e+00 : f32
    %75 = vector.broadcast %cst_41 : f32 to vector<8x128xf32>
    %76 = arith.maximumf %74, %75 : vector<8x128xf32>
    %c0_42 = arith.constant 0 : index
    %c0_43 = arith.constant 0 : index
    %c0_44 = arith.constant 0 : index
    %77 = vector.load %arg6[%c0_42, %c0_43, %c0_44] : memref<1x128x32xf32, #tpu.memory_space<vmem>>, vector<1x128x32xf32>
    %78 = vector.shape_cast %77 : vector<1x128x32xf32> to vector<128x32xf32>
    %cst_45 = arith.constant dense<0.000000e+00> : vector<8x32xf32>
    %79 = tpu.matmul %76, %78, %cst_45 {dimension_numbers = #tpu.dot_dimension_numbers<[1], [0], [0], [1], [0, 0, 1, 1], [], []>} : vector<8x128xf32>, vector<128x32xf32>, vector<8x32xf32> -> vector<8x32xf32>
    %80 = vector.broadcast %10 : vector<1x32xf32> to vector<8x32xf32>
    %81 = arith.addf %79, %80 : vector<8x32xf32>
    %82 = arith.addf %69, %81 : vector<8x32xf32>
    %cst_46 = arith.constant dense<0.000000e+00> : vector<8xf32>
    %83 = vector.multi_reduction <add>, %82, %cst_46 [1] : vector<8x32xf32> to vector<8xf32>
    %84 = vector.shape_cast %83 : vector<8xf32> to vector<8x1xf32>
    %cst_47 = arith.constant 3.200000e+01 : f32
    %85 = vector.broadcast %cst_47 : f32 to vector<8x1xf32>
    %86 = arith.divf %84, %85 : vector<8x1xf32>
    %87 = vector.broadcast %86 : vector<8x1xf32> to vector<8x32xf32>
    %88 = arith.subf %82, %87 : vector<8x32xf32>
    %89 = arith.mulf %88, %88 : vector<8x32xf32>
    %cst_48 = arith.constant dense<0.000000e+00> : vector<8xf32>
    %90 = vector.multi_reduction <add>, %89, %cst_48 [1] : vector<8x32xf32> to vector<8xf32>
    %91 = vector.shape_cast %90 : vector<8xf32> to vector<8x1xf32>
    %cst_49 = arith.constant 3.200000e+01 : f32
    %92 = vector.broadcast %cst_49 : f32 to vector<8x1xf32>
    %93 = arith.divf %91, %92 : vector<8x1xf32>
    %cst_50 = arith.constant 9.99999974E-6 : f32
    %94 = vector.broadcast %cst_50 : f32 to vector<8x1xf32>
    %95 = arith.addf %93, %94 : vector<8x1xf32>
    %96 = math.rsqrt %95 : vector<8x1xf32>
    %97 = vector.broadcast %96 : vector<8x1xf32> to vector<8x32xf32>
    %98 = arith.mulf %88, %97 : vector<8x32xf32>
    %99 = vector.broadcast %11 : vector<1x32xf32> to vector<8x32xf32>
    %100 = arith.mulf %98, %99 : vector<8x32xf32>
    %101 = vector.broadcast %12 : vector<1x32xf32> to vector<8x32xf32>
    %102 = arith.addf %100, %101 : vector<8x32xf32>
    %103 = vector.shape_cast %102 : vector<8x32xf32> to vector<1x8x32xf32>
    %c0_51 = arith.constant 0 : index
    %c0_52 = arith.constant 0 : index
    %c0_53 = arith.constant 0 : index
    %104 = vector.load %arg9[%c0_51, %c0_52, %c0_53] : memref<1x8x32xf32, #tpu.memory_space<vmem>>, vector<1x8x32xf32>
    tpu.vector_store %arg9[%c0_51, %c0_52, %c0_53], %103 {strides = array<i32>} : memref<1x8x32xf32, #tpu.memory_space<vmem>>, vector<1x8x32xf32>,
    return
  }
  func.func @transform_0(%arg0: i32, %arg1: i32) -> (i32, i32, i32) {
    %c0_i32 = arith.constant 0 : i32
    %c0_i32_0 = arith.constant 0 : i32
    %c0_i32_1 = arith.constant 0 : i32
    return %arg0, %c0_i32, %c0_i32_0 : i32, i32, i32
  }
  func.func @transform_1(%arg0: i32, %arg1: i32) -> (i32, i32, i32, i32) {
    %c0_i32 = arith.constant 0 : i32
    %c0_i32_0 = arith.constant 0 : i32
    %c0_i32_1 = arith.constant 0 : i32
    %c0_i32_2 = arith.constant 0 : i32
    return %arg1, %c0_i32, %c0_i32_0, %c0_i32_1 : i32, i32, i32, i32
  }
  func.func @transform_2(%arg0: i32, %arg1: i32) -> (i32, i32, i32, i32) {
    %c0_i32 = arith.constant 0 : i32
    %c0_i32_0 = arith.constant 0 : i32
    %c0_i32_1 = arith.constant 0 : i32
    %c0_i32_2 = arith.constant 0 : i32
    return %arg1, %c0_i32, %c0_i32_0, %c0_i32_1 : i32, i32, i32, i32
  }
  func.func @transform_3(%arg0: i32, %arg1: i32) -> (i32, i32, i32) {
    %c0_i32 = arith.constant 0 : i32
    %c0_i32_0 = arith.constant 0 : i32
    %c0_i32_1 = arith.constant 0 : i32
    return %arg1, %c0_i32, %c0_i32_0 : i32, i32, i32
  }
  func.func @transform_4(%arg0: i32, %arg1: i32) -> (i32, i32, i32) {
    %c0_i32 = arith.constant 0 : i32
    %c0_i32_0 = arith.constant 0 : i32
    %c0_i32_1 = arith.constant 0 : i32
    return %arg1, %c0_i32, %c0_i32_0 : i32, i32, i32
  }
  func.func @transform_5(%arg0: i32, %arg1: i32) -> (i32, i32, i32) {
    %c0_i32 = arith.constant 0 : i32
    %c0_i32_0 = arith.constant 0 : i32
    %c0_i32_1 = arith.constant 0 : i32
    return %arg1, %c0_i32, %c0_i32_0 : i32, i32, i32
  }
  func.func @transform_6(%arg0: i32, %arg1: i32) -> (i32, i32, i32) {
    %c0_i32 = arith.constant 0 : i32
    %c0_i32_0 = arith.constant 0 : i32
    %c0_i32_1 = arith.constant 0 : i32
    return %arg1, %c0_i32, %c0_i32_0 : i32, i32, i32
  }
  func.func @transform_7(%arg0: i32, %arg1: i32) -> (i32, i32, i32) {
    %c0_i32 = arith.constant 0 : i32
    %c0_i32_0 = arith.constant 0 : i32
    %c0_i32_1 = arith.constant 0 : i32
    return %arg0, %c0_i32, %c0_i32_0 : i32, i32, i32
  }
}

</mosaic_0001>

<llo_original>
// kernel: tpu_custom_call.1
$region0: #{tpu_custom_call.1}
  #allocation0 [shape = 'u32[]', space=smem, size = 0x4, offset = 0x4, fixed_abs, tag = 'smem constant byte address 0x4 - core index']
  #allocation1 [shape = 'u32[144,128]{1,0:T(1,128)}', space=vmem, size = 0x12000, scoped, tag = 'internal scratch']
  %s0 = inlined_call_operand.vmem [shape: f32[2,8,32], index: 0, kind: input, shape index: {}]
  %s1 = inlined_call_operand.vmem [shape: f32[2,12,32,16], index: 1, kind: input, shape index: {}]
  %s2 = inlined_call_operand.vmem [shape: f32[2,4,16,32], index: 2, kind: input, shape index: {}]
  %s3 = inlined_call_operand.vmem [shape: f32[2,32,128], index: 3, kind: input, shape index: {}]
  %s4 = inlined_call_operand.vmem [shape: f32[2,128,32], index: 4, kind: input, shape index: {}]
  %s5 = inlined_call_operand.vmem [shape: f32[2,8,32], index: 5, kind: input, shape index: {}]
  %s6 = inlined_call_operand.vmem [shape: f32[2,1,128], index: 6, kind: input, shape index: {}]
  %s7 = inlined_call_operand.hbm [shape: f32[2,8,32], index: 7, kind: output, shape index: {}]
  %s8 = sld [smem:[#allocation0]]
  $region65: #{tpu_custom_call.1} parent=0
    _
  %s10 = ssub.s32 1, %s8
  %s11 = scalar_select 0, %s10, %s8
  $region1: #{tpu_custom_call.1} parent=0
    #allocation2 [shape = 'u8[8192]{0}', space=vmem, size = 0x2000, scoped, tag = 'output window, operand 0']
    #allocation3 [shape = 's32[2]{0}', space=sflag, size = 0x8, scoped, tag = 'scoped memory for tpu_custom_call.1']
    %12 = vsyncpa [#allocation3], 0
    %s13 = scalar_lea.sflag [#allocation3], 1
    %14 = vsyncpa %s13, 0
    loop: start=0, step=1, limit=6
    $region2: #{tpu_custom_call.1} parent=1 // loop_pre_header
      _
    $region3: #{tpu_custom_call.1} parent=1 // loop_header
      %s16 = sphi 0, %s20
      %p17 = scmp.ge.s32.totalorder %s16, 6
      %s23 = sphi 0, %s35
      %s24 = sphi 0, %s31
      %s25 = sphi 0, %s23
      %s26 = sphi 0, %s24
      %s27 = sphi 0, %s25
      %s28 = sphi 0, %s26
      %s38 = sphi 0, %s40
      %s41 = sphi 0, %s38
      %s42 = sphi 0, %s41
      %s58 = sphi 0, %s42
      %s64 = sphi 0, %s66
      %s67 = sphi 0, %s64
      %s68 = sphi 0, %s67
      %s84 = sphi 0, %s68
      %s90 = sphi 0, %s92
      %s93 = sphi 0, %s90
      %s94 = sphi 0, %s93
      %s110 = sphi 0, %s94
      %s116 = sphi 0, %s118
      %s119 = sphi 0, %s116
      %s120 = sphi 0, %s119
      %s136 = sphi 0, %s120
      %s142 = sphi 0, %s144
      %s145 = sphi 0, %s142
      %s146 = sphi 0, %s145
      %s162 = sphi 0, %s146
      %s168 = sphi 0, %s170
      %s171 = sphi 0, %s168
      %s172 = sphi 0, %s171
      %s188 = sphi 0, %s172
      %s194 = sphi 0, %s196
      %s197 = sphi 0, %s194
      %s198 = sphi 0, %s197
      %s214 = sphi 0, %s198
      %s220 = sphi 0, %s222
      %s223 = sphi 0, %s220
      %s224 = sphi 0, %s223
      %s240 = sphi 0, %s224
    $region4: #{tpu_custom_call.1} parent=1 // loop_header_branch
      %19 = sbr.rel (%p17) target = $region8
    $region5: #{tpu_custom_call.1} parent=1 // loop_body
      %s21 = ssub.s32 %s16, 1
      %s22 = ssub.s32 %s16, 2
      %s29 = sadd.s32 1, %s24
      %p30 = scmp.ge.s32.totalorder %s29, 2
      %s31 = scalar_select %p30, 0, %s29
      %s32 = sadd.s32 1, %s23
      %s33 = scalar_select %p30, %s32, %s23
      %p34 = scmp.ge.s32.totalorder %s33, 2
      %s35 = scalar_select %p34, 0, %s33
      %s36 = ssub.s32 %s23, %s35
      %p37 = scmp.eq.s32.totalorder %s36, 0
      %s39 = sadd.s32 %s38, 1
      %s40 = scalar_select %p37, %s38, %s39
      %p43 = pneg %p37
      %p44 = scmp.eq.s32.totalorder %s16, 3
      %p45 = por %p43, %p44
      %p46 = scmp.ne.s32.totalorder %s38, %s41
      %p47 = scmp.eq.s32.totalorder %s16, 0
      %p48 = por %p46, %p47
      %p49 = scmp.ne.s32.totalorder %s38, %s41
      %p50 = scmp.eq.s32.totalorder %s21, 3
      %p51 = por %p49, %p50
      %p52 = scmp.ne.s32.totalorder %s41, %s42
      %p53 = scmp.eq.s32.totalorder %s21, 0
      %p54 = por %p52, %p53
      %p55 = scmp.ne.s32.totalorder %s41, %s42
      %p56 = scmp.eq.s32.totalorder %s22, 3
      %p57 = por %p55, %p56
      %p59 = scmp.ne.s32.totalorder %s42, %s58
      %p60 = scmp.eq.s32.totalorder %s22, 0
      %p61 = por %p59, %p60
      %s62 = ssub.s32 %s24, %s31
      %p63 = scmp.eq.s32.totalorder %s62, 0
      %s65 = sadd.s32 %s64, 1
      %s66 = scalar_select %p63, %s64, %s65
      %p69 = pneg %p63
      %p70 = scmp.eq.s32.totalorder %s16, 3
      %p71 = por %p69, %p70
      %p72 = scmp.ne.s32.totalorder %s64, %s67
      %p73 = scmp.eq.s32.totalorder %s16, 0
      %p74 = por %p72, %p73
      %p75 = scmp.ne.s32.totalorder %s64, %s67
      %p76 = scmp.eq.s32.totalorder %s21, 3
      %p77 = por %p75, %p76
      %p78 = scmp.ne.s32.totalorder %s67, %s68
      %p79 = scmp.eq.s32.totalorder %s21, 0
      %p80 = por %p78, %p79
      %p81 = scmp.ne.s32.totalorder %s67, %s68
      %p82 = scmp.eq.s32.totalorder %s22, 3
      %p83 = por %p81, %p82
      %p85 = scmp.ne.s32.totalorder %s68, %s84
      %p86 = scmp.eq.s32.totalorder %s22, 0
      %p87 = por %p85, %p86
      %s88 = ssub.s32 %s24, %s31
      %p89 = scmp.eq.s32.totalorder %s88, 0
      %s91 = sadd.s32 %s90, 1
      %s92 = scalar_select %p89, %s90, %s91
      %p95 = pneg %p89
      %p96 = scmp.eq.s32.totalorder %s16, 3
      %p97 = por %p95, %p96
      %p98 = scmp.ne.s32.totalorder %s90, %s93
      %p99 = scmp.eq.s32.totalorder %s16, 0
      %p100 = por %p98, %p99
      %p101 = scmp.ne.s32.totalorder %s90, %s93
      %p102 = scmp.eq.s32.totalorder %s21, 3
      %p103 = por %p101, %p102
      %p104 = scmp.ne.s32.totalorder %s93, %s94
      %p105 = scmp.eq.s32.totalorder %s21, 0
      %p106 = por %p104, %p105
      %p107 = scmp.ne.s32.totalorder %s93, %s94
      %p108 = scmp.eq.s32.totalorder %s22, 3
      %p109 = por %p107, %p108
      %p111 = scmp.ne.s32.totalorder %s94, %s110
      %p112 = scmp.eq.s32.totalorder %s22, 0
      %p113 = por %p111, %p112
      %s114 = ssub.s32 %s24, %s31
      %p115 = scmp.eq.s32.totalorder %s114, 0
      %s117 = sadd.s32 %s116, 1
      %s118 = scalar_select %p115, %s116, %s117
      %p121 = pneg %p115
      %p122 = scmp.eq.s32.totalorder %s16, 3
      %p123 = por %p121, %p122
      %p124 = scmp.ne.s32.totalorder %s116, %s119
      %p125 = scmp.eq.s32.totalorder %s16, 0
      %p126 = por %p124, %p125
      %p127 = scmp.ne.s32.totalorder %s116, %s119
      %p128 = scmp.eq.s32.totalorder %s21, 3
      %p129 = por %p127, %p128
      %p130 = scmp.ne.s32.totalorder %s119, %s120
      %p131 = scmp.eq.s32.totalorder %s21, 0
      %p132 = por %p130, %p131
      %p133 = scmp.ne.s32.totalorder %s119, %s120
      %p134 = scmp.eq.s32.totalorder %s22, 3
      %p135 = por %p133, %p134
      %p137 = scmp.ne.s32.totalorder %s120, %s136
      %p138 = scmp.eq.s32.totalorder %s22, 0
      %p139 = por %p137, %p138
      %s140 = ssub.s32 %s24, %s31
      %p141 = scmp.eq.s32.totalorder %s140, 0
      %s143 = sadd.s32 %s142, 1
      %s144 = scalar_select %p141, %s142, %s143
      %p147 = pneg %p141
      %p148 = scmp.eq.s32.totalorder %s16, 3
      %p149 = por %p147, %p148
      %p150 = scmp.ne.s32.totalorder %s142, %s145
      %p151 = scmp.eq.s32.totalorder %s16, 0
      %p152 = por %p150, %p151
      %p153 = scmp.ne.s32.totalorder %s142, %s145
      %p154 = scmp.eq.s32.totalorder %s21, 3
      %p155 = por %p153, %p154
      %p156 = scmp.ne.s32.totalorder %s145, %s146
      %p157 = scmp.eq.s32.totalorder %s21, 0
      %p158 = por %p156, %p157
      %p159 = scmp.ne.s32.totalorder %s145, %s146
      %p160 = scmp.eq.s32.totalorder %s22, 3
      %p161 = por %p159, %p160
      %p163 = scmp.ne.s32.totalorder %s146, %s162
      %p164 = scmp.eq.s32.totalorder %s22, 0
      %p165 = por %p163, %p164
      %s166 = ssub.s32 %s24, %s31
      %p167 = scmp.eq.s32.totalorder %s166, 0
      %s169 = sadd.s32 %s168, 1
      %s170 = scalar_select %p167, %s168, %s169
      %p173 = pneg %p167
      %p174 = scmp.eq.s32.totalorder %s16, 3
      %p175 = por %p173, %p174
      %p176 = scmp.ne.s32.totalorder %s168, %s171
      %p177 = scmp.eq.s32.totalorder %s16, 0
      %p178 = por %p176, %p177
      %p179 = scmp.ne.s32.totalorder %s168, %s171
      %p180 = scmp.eq.s32.totalorder %s21, 3
      %p181 = por %p179, %p180
      %p182 = scmp.ne.s32.totalorder %s171, %s172
      %p183 = scmp.eq.s32.totalorder %s21, 0
      %p184 = por %p182, %p183
      %p185 = scmp.ne.s32.totalorder %s171, %s172
      %p186 = scmp.eq.s32.totalorder %s22, 3
      %p187 = por %p185, %p186
      %p189 = scmp.ne.s32.totalorder %s172, %s188
      %p190 = scmp.eq.s32.totalorder %s22, 0
      %p191 = por %p189, %p190
      %s192 = ssub.s32 %s24, %s31
      %p193 = scmp.eq.s32.totalorder %s192, 0
      %s195 = sadd.s32 %s194, 1
      %s196 = scalar_select %p193, %s194, %s195
      %p199 = pneg %p193
      %p200 = scmp.eq.s32.totalorder %s16, 3
      %p201 = por %p199, %p200
      %p202 = scmp.ne.s32.totalorder %s194, %s197
      %p203 = scmp.eq.s32.totalorder %s16, 0
      %p204 = por %p202, %p203
      %p205 = scmp.ne.s32.totalorder %s194, %s197
      %p206 = scmp.eq.s32.totalorder %s21, 3
      %p207 = por %p205, %p206
      %p208 = scmp.ne.s32.totalorder %s197, %s198
      %p209 = scmp.eq.s32.totalorder %s21, 0
      %p210 = por %p208, %p209
      %p211 = scmp.ne.s32.totalorder %s197, %s198
      %p212 = scmp.eq.s32.totalorder %s22, 3
      %p213 = por %p211, %p212
      %p215 = scmp.ne.s32.totalorder %s198, %s214
      %p216 = scmp.eq.s32.totalorder %s22, 0
      %p217 = por %p215, %p216
      %s218 = ssub.s32 %s23, %s35
      %p219 = scmp.eq.s32.totalorder %s218, 0
      %s221 = sadd.s32 %s220, 1
      %s222 = scalar_select %p219, %s220, %s221
      %p225 = pneg %p219
      %p226 = scmp.eq.s32.totalorder %s16, 3
      %p227 = por %p225, %p226
      %p228 = scmp.ne.s32.totalorder %s220, %s223
      %p229 = scmp.eq.s32.totalorder %s16, 0
      %p230 = por %p228, %p229
      %p231 = scmp.ne.s32.totalorder %s220, %s223
      %p232 = scmp.eq.s32.totalorder %s21, 3
      %p233 = por %p231, %p232
      %p234 = scmp.ne.s32.totalorder %s223, %s224
      %p235 = scmp.eq.s32.totalorder %s21, 0
      %p236 = por %p234, %p235
      %p237 = scmp.ne.s32.totalorder %s223, %s224
      %p238 = scmp.eq.s32.totalorder %s22, 3
      %p239 = por %p237, %p238
      %p241 = scmp.ne.s32.totalorder %s224, %s240
      %p242 = scmp.eq.s32.totalorder %s22, 0
      %p243 = por %p241, %p242
      %p244 = scmp.le.s32.totalorder 1, %s16
      %p245 = scmp.lt.s32.totalorder %s16, 5
      %p246 = pnand %p244, %p245
      %p247 = pneg %p246
      // Predicated region
      $region9: #{tpu_custom_call.1} parent=5 // pred_check
        _
      $region10: #{tpu_custom_call.1} parent=5 // pred_check_branch
        %249 = sbr.rel (%p246) target = $region12
      $region11: #{tpu_custom_call.1} parent=5 // pred_region
        %s250 = ssub.s32 %s16, 1
      $region12: #{tpu_custom_call.1} parent=5 // pred_fallthru
        _
      %p251 = scmp.lt.s32.totalorder %s16, 4
      // Predicated region
      $region13: #{tpu_custom_call.1} parent=5 // pred_check
        %p252 = pneg %p251
      $region14: #{tpu_custom_call.1} parent=5 // pred_check_branch
        %254 = sbr.rel (%p252) target = $region16
      $region15: #{tpu_custom_call.1} parent=5 // pred_region
        // Predicated region
        $region17: #{tpu_custom_call.1} parent=15 // pred_check
          %p255 = pneg %p48
        $region18: #{tpu_custom_call.1} parent=15 // pred_check_branch
          %257 = sbr.rel (%p255) target = $region20
        $region19: #{tpu_custom_call.1} parent=15 // pred_region
          %p258 = scmp.lt.s32.totalorder %s23, 1
          %s259 = scalar_select %p258, %s23, 1
          %s260 = smul.addr %s259, 8
          %s261 = scalar_lea.vmem %s0, %s260
        $region20: #{tpu_custom_call.1} parent=15 // pred_fallthru
          _
        // Predicated region
        $region21: #{tpu_custom_call.1} parent=15 // pred_check
          %p262 = pneg %p74
        $region22: #{tpu_custom_call.1} parent=15 // pred_check_branch
          %264 = sbr.rel (%p262) target = $region24
        $region23: #{tpu_custom_call.1} parent=15 // pred_region
          %p265 = scmp.lt.s32.totalorder %s24, 1
          %s266 = scalar_select %p265, %s24, 1
          %s267 = smul.addr %s266, 48
          %s268 = smul.addr %s267, 8
          %s269 = scalar_lea.vmem %s1, %s268
        $region24: #{tpu_custom_call.1} parent=15 // pred_fallthru
          _
        // Predicated region
        $region25: #{tpu_custom_call.1} parent=15 // pred_check
          %p270 = pneg %p100
        $region26: #{tpu_custom_call.1} parent=15 // pred_check_branch
          %272 = sbr.rel (%p270) target = $region28
        $region27: #{tpu_custom_call.1} parent=15 // pred_region
          %p273 = scmp.lt.s32.totalorder %s24, 1
          %s274 = scalar_select %p273, %s24, 1
          %s275 = smul.addr %s274, 8
          %s276 = smul.addr %s275, 8
          %s277 = scalar_lea.vmem %s2, %s276
        $region28: #{tpu_custom_call.1} parent=15 // pred_fallthru
          _
        // Predicated region
        $region29: #{tpu_custom_call.1} parent=15 // pred_check
          %p278 = pneg %p126
        $region30: #{tpu_custom_call.1} parent=15 // pred_check_branch
          %280 = sbr.rel (%p278) target = $region32
        $region31: #{tpu_custom_call.1} parent=15 // pred_region
          %p281 = scmp.lt.s32.totalorder %s24, 1
          %s282 = scalar_select %p281, %s24, 1
          %s283 = smul.addr %s282, 4
          %s284 = smul.addr %s283, 8
          %s285 = scalar_lea.vmem %s3, %s284
        $region32: #{tpu_custom_call.1} parent=15 // pred_fallthru
          _
        // Predicated region
        $region33: #{tpu_custom_call.1} parent=15 // pred_check
          %p286 = pneg %p152
        $region34: #{tpu_custom_call.1} parent=15 // pred_check_branch
          %288 = sbr.rel (%p286) target = $region36
        $region35: #{tpu_custom_call.1} parent=15 // pred_region
          %p289 = scmp.lt.s32.totalorder %s24, 1
          %s290 = scalar_select %p289, %s24, 1
          %s291 = smul.addr %s290, 16
          %s292 = smul.addr %s291, 8
          %s293 = scalar_lea.vmem %s4, %s292
        $region36: #{tpu_custom_call.1} parent=15 // pred_fallthru
          _
        // Predicated region
        $region37: #{tpu_custom_call.1} parent=15 // pred_check
          %p294 = pneg %p178
        $region38: #{tpu_custom_call.1} parent=15 // pred_check_branch
          %296 = sbr.rel (%p294) target = $region40
        $region39: #{tpu_custom_call.1} parent=15 // pred_region
          %p297 = scmp.lt.s32.totalorder %s24, 1
          %s298 = scalar_select %p297, %s24, 1
          %s299 = smul.addr %s298, 8
          %s300 = scalar_lea.vmem %s5, %s299
        $region40: #{tpu_custom_call.1} parent=15 // pred_fallthru
          _
        // Predicated region
        $region41: #{tpu_custom_call.1} parent=15 // pred_check
          %p301 = pneg %p204
        $region42: #{tpu_custom_call.1} parent=15 // pred_check_branch
          %303 = sbr.rel (%p301) target = $region44
        $region43: #{tpu_custom_call.1} parent=15 // pred_region
          %p304 = scmp.lt.s32.totalorder %s24, 1
          %s305 = scalar_select %p304, %s24, 1
          %s306 = scalar_lea.vmem %s6, %s305
        $region44: #{tpu_custom_call.1} parent=15 // pred_fallthru
          _
      $region16: #{tpu_custom_call.1} parent=5 // pred_fallthru
        _
      %p307 = scmp.le.s32.totalorder 1, %s16
      %p308 = scmp.lt.s32.totalorder %s16, 5
      %p309 = pnand %p307, %p308
      %p310 = pneg %p309
      // Predicated region
      $region45: #{tpu_custom_call.1} parent=5 // pred_check
        _
      $region46: #{tpu_custom_call.1} parent=5 // pred_check_branch
        %312 = sbr.rel (%p309) target = $region48
      $region47: #{tpu_custom_call.1} parent=5 // pred_region
        %s313 = ssub.s32 %s16, 1
        %p314 = scmp.lt.s32.totalorder %s25, 1
        %s315 = scalar_select %p314, %s25, 1
        %s316 = smul.addr %s315, 8
        %s317 = scalar_lea.vmem %s0, %s316
        %p318 = pneg %p54
        %p319 = pneg %p51
        %p320 = scmp.lt.s32.totalorder %s26, 1
        %s321 = scalar_select %p320, %s26, 1
        %s322 = smul.addr %s321, 48
        %s323 = smul.addr %s322, 8
        %s324 = scalar_lea.vmem %s1, %s323
        %p325 = pneg %p80
        %p326 = pneg %p77
        %p327 = scmp.lt.s32.totalorder %s26, 1
        %s328 = scalar_select %p327, %s26, 1
        %s329 = smul.addr %s328, 8
        %s330 = smul.addr %s329, 8
        %s331 = scalar_lea.vmem %s2, %s330
        %p332 = pneg %p106
        %p333 = pneg %p103
        %p334 = scmp.lt.s32.totalorder %s26, 1
        %s335 = scalar_select %p334, %s26, 1
        %s336 = smul.addr %s335, 4
        %s337 = smul.addr %s336, 8
        %s338 = scalar_lea.vmem %s3, %s337
        %p339 = pneg %p132
        %p340 = pneg %p129
        %p341 = scmp.lt.s32.totalorder %s26, 1
        %s342 = scalar_select %p341, %s26, 1
        %s343 = smul.addr %s342, 16
        %s344 = smul.addr %s343, 8
        %s345 = scalar_lea.vmem %s4, %s344
        %p346 = pneg %p158
        %p347 = pneg %p155
        %p348 = scmp.lt.s32.totalorder %s26, 1
        %s349 = scalar_select %p348, %s26, 1
        %s350 = smul.addr %s349, 8
        %s351 = scalar_lea.vmem %s5, %s350
        %p352 = pneg %p184
        %p353 = pneg %p181
        %p354 = scmp.lt.s32.totalorder %s26, 1
        %s355 = scalar_select %p354, %s26, 1
        %s356 = scalar_lea.vmem %s6, %s355
        %p357 = pneg %p210
        %p358 = pneg %p207
        %p359 = pneg %p236
        %p360 = pneg %p233
        %s361 = sand.u32 %s223, 1
        %s362 = scalar_lea.sflag [#allocation3], %s361
        %s363 = sand.u32 %s223, 1
        %s364 = smul.addr %s363, 8
        %s365 = scalar_lea.vmem [#allocation2], %s364
        %p366 = scmp.lt.s32.totalorder %s25, 1
        %s367 = scalar_select %p366, %s25, 1
        %s368 = smul.addr %s367, 8
        %s369 = scalar_lea.vmem %s0, %s368
        %p370 = scmp.lt.s32.totalorder %s26, 1
        %s371 = scalar_select %p370, %s26, 1
        %s372 = smul.addr %s371, 48
        %s373 = smul.addr %s372, 8
        %s374 = scalar_lea.vmem %s1, %s373
        %p375 = scmp.lt.s32.totalorder %s26, 1
        %s376 = scalar_select %p375, %s26, 1
        %s377 = smul.addr %s376, 8
        %s378 = smul.addr %s377, 8
        %s379 = scalar_lea.vmem %s2, %s378
        %p380 = scmp.lt.s32.totalorder %s26, 1
        %s381 = scalar_select %p380, %s26, 1
        %s382 = smul.addr %s381, 4
        %s383 = smul.addr %s382, 8
        %s384 = scalar_lea.vmem %s3, %s383
        %p385 = scmp.lt.s32.totalorder %s26, 1
        %s386 = scalar_select %p385, %s26, 1
        %s387 = smul.addr %s386, 16
        %s388 = smul.addr %s387, 8
        %s389 = scalar_lea.vmem %s4, %s388
        %p390 = scmp.lt.s32.totalorder %s26, 1
        %s391 = scalar_select %p390, %s26, 1
        %s392 = smul.addr %s391, 8
        %s393 = scalar_lea.vmem %s5, %s392
        %p394 = scmp.lt.s32.totalorder %s26, 1
        %s395 = scalar_select %p394, %s26, 1
        %s396 = scalar_lea.vmem %s6, %s395
        %p397 = scmp.eq.s32.totalorder %s26, 0
        // Predicated region
        $region49: #{tpu_custom_call.1} parent=47 // pred_check
          %p398 = pneg %p397
        $region50: #{tpu_custom_call.1} parent=47 // pred_check_branch
          %400 = sbr.rel (%p398) target = $region52
        $region51: #{tpu_custom_call.1} parent=47 // pred_region
          %v401 = vld [vmem:[%s369] sm:$0xff]
          %vm402 = vcmask 261120
          %403 = vst.msk [vmem:[%s365] sm:$0xff] %vm402, %v401
        $region52: #{tpu_custom_call.1} parent=47 // pred_fallthru
          _
        %v404 = vld [vmem:[%s365] sm:$0xff]
        %v405 = vld [vmem:[%s393] sm:$0xff]
        %v406 = vld [vmem:[%s396] sm:$0x1]
        %v407 = vld [vmem:[%s374] sm:$0xff]
        %v408 = vld [vmem:[%s374 + $0x8] sm:$0xff]
        %v409 = vld [vmem:[%s374 + $0x10] sm:$0xff]
        %v410 = vld [vmem:[%s374 + $0x18] sm:$0xff]
        %v411 = vld [vmem:[%s374 + $0x20] sm:$0xff]
        %v412 = vld [vmem:[%s374 + $0x28] sm:$0xff]
        %v413 = vld [vmem:[%s374 + $0x30] sm:$0xff]
        %v414 = vld [vmem:[%s374 + $0x38] sm:$0xff]
        %v415 = vld [vmem:[%s374 + $0x40] sm:$0xff]
        %v416 = vld [vmem:[%s374 + $0x48] sm:$0xff]
        %v417 = vld [vmem:[%s374 + $0x50] sm:$0xff]
        %v418 = vld [vmem:[%s374 + $0x58] sm:$0xff]
        %v419 = vld [vmem:[%s374 + $0x60] sm:$0xff]
        %v420 = vld [vmem:[%s374 + $0x68] sm:$0xff]
        %v421 = vld [vmem:[%s374 + $0x70] sm:$0xff]
        %v422 = vld [vmem:[%s374 + $0x78] sm:$0xff]
        %s423 = scalar_lea.vmem %s374, 128
        %v424 = vld [vmem:[%s423] sm:$0xff]
        %v425 = vld [vmem:[%s423 + $0x8] sm:$0xff]
        %v426 = vld [vmem:[%s423 + $0x10] sm:$0xff]
        %v427 = vld [vmem:[%s423 + $0x18] sm:$0xff]
        %v428 = vld [vmem:[%s423 + $0x20] sm:$0xff]
        %v429 = vld [vmem:[%s423 + $0x28] sm:$0xff]
        %v430 = vld [vmem:[%s423 + $0x30] sm:$0xff]
        %v431 = vld [vmem:[%s423 + $0x38] sm:$0xff]
        %v432 = vld [vmem:[%s423 + $0x40] sm:$0xff]
        %v433 = vld [vmem:[%s423 + $0x48] sm:$0xff]
        %v434 = vld [vmem:[%s423 + $0x50] sm:$0xff]
        %v435 = vld [vmem:[%s423 + $0x58] sm:$0xff]
        %v436 = vld [vmem:[%s423 + $0x60] sm:$0xff]
        %v437 = vld [vmem:[%s423 + $0x68] sm:$0xff]
        %v438 = vld [vmem:[%s423 + $0x70] sm:$0xff]
        %v439 = vld [vmem:[%s423 + $0x78] sm:$0xff]
        %s440 = scalar_lea.vmem %s374, 256
        %v441 = vld [vmem:[%s440] sm:$0xff]
        %v442 = vld [vmem:[%s440 + $0x8] sm:$0xff]
        %v443 = vld [vmem:[%s440 + $0x10] sm:$0xff]
        %v444 = vld [vmem:[%s440 + $0x18] sm:$0xff]
        %v445 = vld [vmem:[%s440 + $0x20] sm:$0xff]
        %v446 = vld [vmem:[%s440 + $0x28] sm:$0xff]
        %v447 = vld [vmem:[%s440 + $0x30] sm:$0xff]
        %v448 = vld [vmem:[%s440 + $0x38] sm:$0xff]
        %v449 = vld [vmem:[%s440 + $0x40] sm:$0xff]
        %v450 = vld [vmem:[%s440 + $0x48] sm:$0xff]
        %v451 = vld [vmem:[%s440 + $0x50] sm:$0xff]
        %v452 = vld [vmem:[%s440 + $0x58] sm:$0xff]
        %v453 = vld [vmem:[%s440 + $0x60] sm:$0xff]
        %v454 = vld [vmem:[%s440 + $0x68] sm:$0xff]
        %v455 = vld [vmem:[%s440 + $0x70] sm:$0xff]
        %v456 = vld [vmem:[%s440 + $0x78] sm:$0xff]
        %vm457 = vcmask 261120
        %v459 = vsel %vm457, %v404, 0
        %461 = vmatprep.subr.mxu0 0.0
        %462 = vmatpush1.msra.mxu0 %v407
        %463 = vmatprep.subr.mxu0 0.0
        %464 = vmatpush1.msra.mxu0 %v408
        %465 = vmatprep.subr.mxu0 0.0
        %466 = vmatpush1.msra.mxu0 %v409
        %467 = vmatprep.subr.mxu0 0.0
        %468 = vmatpush1.msra.mxu0 %v410
        %469 = vmatprep.subr.mxu0 0.0
        %470 = vmatpush1.msra.mxu0 0.0
        %471 = vmatprep.subr.mxu0 0.0
        %472 = vmatpush1.msra.mxu0 0.0
        %473 = vmatprep.subr.mxu0 0.0
        %474 = vmatpush1.msra.mxu0 0.0
        %475 = vmatprep.subr.mxu0 0.0
        %476 = vmatpush1.msra.mxu0 0.0
        %477 = vmatprep.subr.mxu0 0.0
        %478 = vmatpush1.msra.mxu0 0.0
        %479 = vmatprep.subr.mxu0 0.0
        %480 = vmatpush1.msra.mxu0 0.0
        %481 = vmatprep.subr.mxu0 0.0
        %482 = vmatpush1.msra.mxu0 0.0
        %483 = vmatprep.subr.mxu0 0.0
        %484 = vmatpush1.msra.mxu0 0.0
        %485 = vmatprep.subr.mxu0 0.0
        %486 = vmatpush1.msra.mxu0 0.0
        %487 = vmatprep.subr.mxu0 0.0
        %488 = vmatpush1.msra.mxu0 0.0
        %489 = vmatprep.subr.mxu0 0.0
        %490 = vmatpush1.msra.mxu0 0.0
        %491 = vmatprep.subr.mxu0 0.0
        %492 = vmatpush1.msra.mxu0 0.0
        %493 = vmatprep.subr.mxu0 0.0
        %494 = vmatpush1.msra.mxu0 0.0
        %495 = vmatprep.subr.mxu0 0.0
        %496 = vmatpush1.msra.mxu0 0.0
        %497 = vmatprep.subr.mxu0 0.0
        %498 = vmatpush1.msra.mxu0 0.0
        %499 = vmatprep.subr.mxu0 0.0
        %500 = vmatpush1.msra.mxu0 0.0
        %501 = vmatprep.subr.mxu0 0.0
        %502 = vmatpush1.msra.mxu0 0.0
        %503 = vmatprep.subr.mxu0 0.0
        %504 = vmatpush1.msra.mxu0 0.0
        %505 = vmatprep.subr.mxu0 0.0
        %506 = vmatpush1.msra.mxu0 0.0
        %507 = vmatprep.subr.mxu0 0.0
        %508 = vmatpush1.msra.mxu0 0.0
        %509 = vmatprep.subr.mxu0 0.0
        %510 = vmatpush1.msra.mxu0 0.0
        %511 = vmatprep.subr.mxu0 0.0
        %512 = vmatpush1.msra.mxu0 0.0
        %513 = vmatprep.subr.mxu0 0.0
        %514 = vmatpush1.msra.mxu0 0.0
        %515 = vmatprep.subr.mxu0 0.0
        %516 = vmatpush1.msra.mxu0 0.0
        %517 = vmatprep.subr.mxu0 0.0
        %518 = vmatpush1.msra.mxu0 0.0
        %519 = vmatprep.subr.mxu0 0.0
        %520 = vmatpush1.msra.mxu0 0.0
        %521 = vmatprep.subr.mxu0 0.0
        %522 = vmatpush1.msra.mxu0 0.0
        %523 = vmatprep.subr.mxu0 0.0
        %524 = vmatpush1.msra.mxu0 0.0
        %525 = vmatprep.mubr.f32.mxu0 0.0
        %526 = vmatmul.mubr.f32.gmra.mrb[0].mxu0 %v459
        %v527 = vpop.f32.mrb[0].mxu0
        %v528 = vadd.f32 0.0, %v527
        %v529 = vpop.f32.mrb[0].mxu0
        %530 = vdwg.mxu0
        %531 = vmatprep.subr.mxu0 0.0
        %532 = vmatpush1.msra.mxu0 %v411
        %533 = vmatprep.subr.mxu0 0.0
        %534 = vmatpush1.msra.mxu0 %v412
        %535 = vmatprep.subr.mxu0 0.0
        %536 = vmatpush1.msra.mxu0 %v413
        %537 = vmatprep.subr.mxu0 0.0
        %538 = vmatpush1.msra.mxu0 %v414
        %539 = vmatprep.subr.mxu0 0.0
        %540 = vmatpush1.msra.mxu0 0.0
        %541 = vmatprep.subr.mxu0 0.0
        %542 = vmatpush1.msra.mxu0 0.0
        %543 = vmatprep.subr.mxu0 0.0
        %544 = vmatpush1.msra.mxu0 0.0
        %545 = vmatprep.subr.mxu0 0.0
        %546 = vmatpush1.msra.mxu0 0.0
        %547 = vmatprep.subr.mxu0 0.0
        %548 = vmatpush1.msra.mxu0 0.0
        %549 = vmatprep.subr.mxu0 0.0
        %550 = vmatpush1.msra.mxu0 0.0
        %551 = vmatprep.subr.mxu0 0.0
        %552 = vmatpush1.msra.mxu0 0.0
        %553 = vmatprep.subr.mxu0 0.0
        %554 = vmatpush1.msra.mxu0 0.0
        %555 = vmatprep.subr.mxu0 0.0
        %556 = vmatpush1.msra.mxu0 0.0
        %557 = vmatprep.subr.mxu0 0.0
        %558 = vmatpush1.msra.mxu0 0.0
        %559 = vmatprep.subr.mxu0 0.0
        %560 = vmatpush1.msra.mxu0 0.0
        %561 = vmatprep.subr.mxu0 0.0
        %562 = vmatpush1.msra.mxu0 0.0
        %563 = vmatprep.subr.mxu0 0.0
        %564 = vmatpush1.msra.mxu0 0.0
        %565 = vmatprep.subr.mxu0 0.0
        %566 = vmatpush1.msra.mxu0 0.0
        %567 = vmatprep.subr.mxu0 0.0
        %568 = vmatpush1.msra.mxu0 0.0
        %569 = vmatprep.subr.mxu0 0.0
        %570 = vmatpush1.msra.mxu0 0.0
        %571 = vmatprep.subr.mxu0 0.0
        %572 = vmatpush1.msra.mxu0 0.0
        %573 = vmatprep.subr.mxu0 0.0
        %574 = vmatpush1.msra.mxu0 0.0
        %575 = vmatprep.subr.mxu0 0.0
        %576 = vmatpush1.msra.mxu0 0.0
        %577 = vmatprep.subr.mxu0 0.0
        %578 = vmatpush1.msra.mxu0 0.0
        %579 = vmatprep.subr.mxu0 0.0
        %580 = vmatpush1.msra.mxu0 0.0
        %581 = vmatprep.subr.mxu0 0.0
        %582 = vmatpush1.msra.mxu0 0.0
        %583 = vmatprep.subr.mxu0 0.0
        %584 = vmatpush1.msra.mxu0 0.0
        %585 = vmatprep.subr.mxu0 0.0
        %586 = vmatpush1.msra.mxu0 0.0
        %587 = vmatprep.subr.mxu0 0.0
        %588 = vmatpush1.msra.mxu0 0.0
        %589 = vmatprep.subr.mxu0 0.0
        %590 = vmatpush1.msra.mxu0 0.0
        %591 = vmatprep.subr.mxu0 0.0
        %592 = vmatpush1.msra.mxu0 0.0
        %593 = vmatprep.subr.mxu0 0.0
        %594 = vmatpush1.msra.mxu0 0.0
        %595 = vmatprep.mubr.f32.mxu0 0.0
        %596 = vmatmul.mubr.f32.gmra.mrb[0].mxu0 %v459
        %v597 = vpop.f32.mrb[0].mxu0
        %v598 = vadd.f32 0.0, %v597
        %v599 = vpop.f32.mrb[0].mxu0
        %600 = vdwg.mxu0
        %601 = vmatprep.subr.mxu0 0.0
        %602 = vmatpush1.msra.mxu0 %v415
        %603 = vmatprep.subr.mxu0 0.0
        %604 = vmatpush1.msra.mxu0 %v416
        %605 = vmatprep.subr.mxu0 0.0
        %606 = vmatpush1.msra.mxu0 %v417
        %607 = vmatprep.subr.mxu0 0.0
        %608 = vmatpush1.msra.mxu0 %v418
        %609 = vmatprep.subr.mxu0 0.0
        %610 = vmatpush1.msra.mxu0 0.0
        %611 = vmatprep.subr.mxu0 0.0
        %612 = vmatpush1.msra.mxu0 0.0
        %613 = vmatprep.subr.mxu0 0.0
        %614 = vmatpush1.msra.mxu0 0.0
        %615 = vmatprep.subr.mxu0 0.0
        %616 = vmatpush1.msra.mxu0 0.0
        %617 = vmatprep.subr.mxu0 0.0
        %618 = vmatpush1.msra.mxu0 0.0
        %619 = vmatprep.subr.mxu0 0.0
        %620 = vmatpush1.msra.mxu0 0.0
        %621 = vmatprep.subr.mxu0 0.0
        %622 = vmatpush1.msra.mxu0 0.0
        %623 = vmatprep.subr.mxu0 0.0
        %624 = vmatpush1.msra.mxu0 0.0
        %625 = vmatprep.subr.mxu0 0.0
        %626 = vmatpush1.msra.mxu0 0.0
        %627 = vmatprep.subr.mxu0 0.0
        %628 = vmatpush1.msra.mxu0 0.0
        %629 = vmatprep.subr.mxu0 0.0
        %630 = vmatpush1.msra.mxu0 0.0
        %631 = vmatprep.subr.mxu0 0.0
        %632 = vmatpush1.msra.mxu0 0.0
        %633 = vmatprep.subr.mxu0 0.0
        %634 = vmatpush1.msra.mxu0 0.0
        %635 = vmatprep.subr.mxu0 0.0
        %636 = vmatpush1.msra.mxu0 0.0
        %637 = vmatprep.subr.mxu0 0.0
        %638 = vmatpush1.msra.mxu0 0.0
        %639 = vmatprep.subr.mxu0 0.0
        %640 = vmatpush1.msra.mxu0 0.0
        %641 = vmatprep.subr.mxu0 0.0
        %642 = vmatpush1.msra.mxu0 0.0
        %643 = vmatprep.subr.mxu0 0.0
        %644 = vmatpush1.msra.mxu0 0.0
        %645 = vmatprep.subr.mxu0 0.0
        %646 = vmatpush1.msra.mxu0 0.0
        %647 = vmatprep.subr.mxu0 0.0
        %648 = vmatpush1.msra.mxu0 0.0
        %649 = vmatprep.subr.mxu0 0.0
        %650 = vmatpush1.msra.mxu0 0.0
        %651 = vmatprep.subr.mxu0 0.0
        %652 = vmatpush1.msra.mxu0 0.0
        %653 = vmatprep.subr.mxu0 0.0
        %654 = vmatpush1.msra.mxu0 0.0
        %655 = vmatprep.subr.mxu0 0.0
        %656 = vmatpush1.msra.mxu0 0.0
        %657 = vmatprep.subr.mxu0 0.0
        %658 = vmatpush1.msra.mxu0 0.0
        %659 = vmatprep.subr.mxu0 0.0
        %660 = vmatpush1.msra.mxu0 0.0
        %661 = vmatprep.subr.mxu0 0.0
        %662 = vmatpush1.msra.mxu0 0.0
        %663 = vmatprep.subr.mxu0 0.0
        %664 = vmatpush1.msra.mxu0 0.0
        %665 = vmatprep.mubr.f32.mxu0 0.0
        %666 = vmatmul.mubr.f32.gmra.mrb[0].mxu0 %v459
        %v667 = vpop.f32.mrb[0].mxu0
        %v668 = vadd.f32 0.0, %v667
        %v669 = vpop.f32.mrb[0].mxu0
        %670 = vdwg.mxu0
        %671 = vmatprep.subr.mxu0 0.0
        %672 = vmatpush1.msra.mxu0 %v419
        %673 = vmatprep.subr.mxu0 0.0
        %674 = vmatpush1.msra.mxu0 %v420
        %675 = vmatprep.subr.mxu0 0.0
        %676 = vmatpush1.msra.mxu0 %v421
        %677 = vmatprep.subr.mxu0 0.0
        %678 = vmatpush1.msra.mxu0 %v422
        %679 = vmatprep.subr.mxu0 0.0
        %680 = vmatpush1.msra.mxu0 0.0
        %681 = vmatprep.subr.mxu0 0.0
        %682 = vmatpush1.msra.mxu0 0.0
        %683 = vmatprep.subr.mxu0 0.0
        %684 = vmatpush1.msra.mxu0 0.0
        %685 = vmatprep.subr.mxu0 0.0
        %686 = vmatpush1.msra.mxu0 0.0
        %687 = vmatprep.subr.mxu0 0.0
        %688 = vmatpush1.msra.mxu0 0.0
        %689 = vmatprep.subr.mxu0 0.0
        %690 = vmatpush1.msra.mxu0 0.0
        %691 = vmatprep.subr.mxu0 0.0
        %692 = vmatpush1.msra.mxu0 0.0
        %693 = vmatprep.subr.mxu0 0.0
        %694 = vmatpush1.msra.mxu0 0.0
        %695 = vmatprep.subr.mxu0 0.0
        %696 = vmatpush1.msra.mxu0 0.0
        %697 = vmatprep.subr.mxu0 0.0
        %698 = vmatpush1.msra.mxu0 0.0
        %699 = vmatprep.subr.mxu0 0.0
        %700 = vmatpush1.msra.mxu0 0.0
        %701 = vmatprep.subr.mxu0 0.0
        %702 = vmatpush1.msra.mxu0 0.0
        %703 = vmatprep.subr.mxu0 0.0
        %704 = vmatpush1.msra.mxu0 0.0
        %705 = vmatprep.subr.mxu0 0.0
        %706 = vmatpush1.msra.mxu0 0.0
        %707 = vmatprep.subr.mxu0 0.0
        %708 = vmatpush1.msra.mxu0 0.0
        %709 = vmatprep.subr.mxu0 0.0
        %710 = vmatpush1.msra.mxu0 0.0
        %711 = vmatprep.subr.mxu0 0.0
        %712 = vmatpush1.msra.mxu0 0.0
        %713 = vmatprep.subr.mxu0 0.0
        %714 = vmatpush1.msra.mxu0 0.0
        %715 = vmatprep.subr.mxu0 0.0
        %716 = vmatpush1.msra.mxu0 0.0
        %717 = vmatprep.subr.mxu0 0.0
        %718 = vmatpush1.msra.mxu0 0.0
        %719 = vmatprep.subr.mxu0 0.0
        %720 = vmatpush1.msra.mxu0 0.0
        %721 = vmatprep.subr.mxu0 0.0
        %722 = vmatpush1.msra.mxu0 0.0
        %723 = vmatprep.subr.mxu0 0.0
        %724 = vmatpush1.msra.mxu0 0.0
        %725 = vmatprep.subr.mxu0 0.0
        %726 = vmatpush1.msra.mxu0 0.0
        %727 = vmatprep.subr.mxu0 0.0
        %728 = vmatpush1.msra.mxu0 0.0
        %729 = vmatprep.subr.mxu0 0.0
        %730 = vmatpush1.msra.mxu0 0.0
        %731 = vmatprep.subr.mxu0 0.0
        %732 = vmatpush1.msra.mxu0 0.0
        %733 = vmatprep.subr.mxu0 0.0
        %734 = vmatpush1.msra.mxu0 0.0
        %735 = vmatprep.mubr.f32.mxu0 0.0
        %736 = vmatmul.mubr.f32.gmra.mrb[0].mxu0 %v459
        %v737 = vpop.f32.mrb[0].mxu0
        %v738 = vadd.f32 0.0, %v737
        %v739 = vpop.f32.mrb[0].mxu0
        %740 = vdwg.mxu0
        %741 = vmatprep.subr.mxu0 0.0
        %742 = vmatpush1.msra.mxu0 %v424
        %743 = vmatprep.subr.mxu0 0.0
        %744 = vmatpush1.msra.mxu0 %v425
        %745 = vmatprep.subr.mxu0 0.0
        %746 = vmatpush1.msra.mxu0 %v426
        %747 = vmatprep.subr.mxu0 0.0
        %748 = vmatpush1.msra.mxu0 %v427
        %749 = vmatprep.subr.mxu0 0.0
        %750 = vmatpush1.msra.mxu0 0.0
        %751 = vmatprep.subr.mxu0 0.0
        %752 = vmatpush1.msra.mxu0 0.0
        %753 = vmatprep.subr.mxu0 0.0
        %754 = vmatpush1.msra.mxu0 0.0
        %755 = vmatprep.subr.mxu0 0.0
        %756 = vmatpush1.msra.mxu0 0.0
        %757 = vmatprep.subr.mxu0 0.0
        %758 = vmatpush1.msra.mxu0 0.0
        %759 = vmatprep.subr.mxu0 0.0
        %760 = vmatpush1.msra.mxu0 0.0
        %761 = vmatprep.subr.mxu0 0.0
        %762 = vmatpush1.msra.mxu0 0.0
        %763 = vmatprep.subr.mxu0 0.0
        %764 = vmatpush1.msra.mxu0 0.0
        %765 = vmatprep.subr.mxu0 0.0
        %766 = vmatpush1.msra.mxu0 0.0
        %767 = vmatprep.subr.mxu0 0.0
        %768 = vmatpush1.msra.mxu0 0.0
        %769 = vmatprep.subr.mxu0 0.0
        %770 = vmatpush1.msra.mxu0 0.0
        %771 = vmatprep.subr.mxu0 0.0
        %772 = vmatpush1.msra.mxu0 0.0
        %773 = vmatprep.subr.mxu0 0.0
        %774 = vmatpush1.msra.mxu0 0.0
        %775 = vmatprep.subr.mxu0 0.0
        %776 = vmatpush1.msra.mxu0 0.0
        %777 = vmatprep.subr.mxu0 0.0
        %778 = vmatpush1.msra.mxu0 0.0
        %779 = vmatprep.subr.mxu0 0.0
        %780 = vmatpush1.msra.mxu0 0.0
        %781 = vmatprep.subr.mxu0 0.0
        %782 = vmatpush1.msra.mxu0 0.0
        %783 = vmatprep.subr.mxu0 0.0
        %784 = vmatpush1.msra.mxu0 0.0
        %785 = vmatprep.subr.mxu0 0.0
        %786 = vmatpush1.msra.mxu0 0.0
        %787 = vmatprep.subr.mxu0 0.0
        %788 = vmatpush1.msra.mxu0 0.0
        %789 = vmatprep.subr.mxu0 0.0
        %790 = vmatpush1.msra.mxu0 0.0
        %791 = vmatprep.subr.mxu0 0.0
        %792 = vmatpush1.msra.mxu0 0.0
        %793 = vmatprep.subr.mxu0 0.0
        %794 = vmatpush1.msra.mxu0 0.0
        %795 = vmatprep.subr.mxu0 0.0
        %796 = vmatpush1.msra.mxu0 0.0
        %797 = vmatprep.subr.mxu0 0.0
        %798 = vmatpush1.msra.mxu0 0.0
        %799 = vmatprep.subr.mxu0 0.0
        %800 = vmatpush1.msra.mxu0 0.0
        %801 = vmatprep.subr.mxu0 0.0
        %802 = vmatpush1.msra.mxu0 0.0
        %803 = vmatprep.subr.mxu0 0.0
        %804 = vmatpush1.msra.mxu0 0.0
        %805 = vmatprep.mubr.f32.mxu0 0.0
        %806 = vmatmul.mubr.f32.gmra.mrb[0].mxu0 %v459
        %v807 = vpop.f32.mrb[0].mxu0
        %v808 = vadd.f32 0.0, %v807
        %v809 = vpop.f32.mrb[0].mxu0
        %810 = vdwg.mxu0
        %811 = vmatprep.subr.mxu0 0.0
        %812 = vmatpush1.msra.mxu0 %v428
        %813 = vmatprep.subr.mxu0 0.0
        %814 = vmatpush1.msra.mxu0 %v429
        %815 = vmatprep.subr.mxu0 0.0
        %816 = vmatpush1.msra.mxu0 %v430
        %817 = vmatprep.subr.mxu0 0.0
        %818 = vmatpush1.msra.mxu0 %v431
        %819 = vmatprep.subr.mxu0 0.0
        %820 = vmatpush1.msra.mxu0 0.0
        %821 = vmatprep.subr.mxu0 0.0
        %822 = vmatpush1.msra.mxu0 0.0
        %823 = vmatprep.subr.mxu0 0.0
        %824 = vmatpush1.msra.mxu0 0.0
        %825 = vmatprep.subr.mxu0 0.0
        %826 = vmatpush1.msra.mxu0 0.0
        %827 = vmatprep.subr.mxu0 0.0
        %828 = vmatpush1.msra.mxu0 0.0
        %829 = vmatprep.subr.mxu0 0.0
        %830 = vmatpush1.msra.mxu0 0.0
        %831 = vmatprep.subr.mxu0 0.0
        %832 = vmatpush1.msra.mxu0 0.0
        %833 = vmatprep.subr.mxu0 0.0
        %834 = vmatpush1.msra.mxu0 0.0
        %835 = vmatprep.subr.mxu0 0.0
        %836 = vmatpush1.msra.mxu0 0.0
        %837 = vmatprep.subr.mxu0 0.0
        %838 = vmatpush1.msra.mxu0 0.0
        %839 = vmatprep.subr.mxu0 0.0
        %840 = vmatpush1.msra.mxu0 0.0
        %841 = vmatprep.subr.mxu0 0.0
        %842 = vmatpush1.msra.mxu0 0.0
        %843 = vmatprep.subr.mxu0 0.0
        %844 = vmatpush1.msra.mxu0 0.0
        %845 = vmatprep.subr.mxu0 0.0
        %846 = vmatpush1.msra.mxu0 0.0
        %847 = vmatprep.subr.mxu0 0.0
        %848 = vmatpush1.msra.mxu0 0.0
        %849 = vmatprep.subr.mxu0 0.0
        %850 = vmatpush1.msra.mxu0 0.0
        %851 = vmatprep.subr.mxu0 0.0
        %852 = vmatpush1.msra.mxu0 0.0
        %853 = vmatprep.subr.mxu0 0.0
        %854 = vmatpush1.msra.mxu0 0.0
        %855 = vmatprep.subr.mxu0 0.0
        %856 = vmatpush1.msra.mxu0 0.0
        %857 = vmatprep.subr.mxu0 0.0
        %858 = vmatpush1.msra.mxu0 0.0
        %859 = vmatprep.subr.mxu0 0.0
        %860 = vmatpush1.msra.mxu0 0.0
        %861 = vmatprep.subr.mxu0 0.0
        %862 = vmatpush1.msra.mxu0 0.0
        %863 = vmatprep.subr.mxu0 0.0
        %864 = vmatpush1.msra.mxu0 0.0
        %865 = vmatprep.subr.mxu0 0.0
        %866 = vmatpush1.msra.mxu0 0.0
        %867 = vmatprep.subr.mxu0 0.0
        %868 = vmatpush1.msra.mxu0 0.0
        %869 = vmatprep.subr.mxu0 0.0
        %870 = vmatpush1.msra.mxu0 0.0
        %871 = vmatprep.subr.mxu0 0.0
        %872 = vmatpush1.msra.mxu0 0.0
        %873 = vmatprep.subr.mxu0 0.0
        %874 = vmatpush1.msra.mxu0 0.0
        %875 = vmatprep.mubr.f32.mxu0 0.0
        %876 = vmatmul.mubr.f32.gmra.mrb[0].mxu0 %v459
        %v877 = vpop.f32.mrb[0].mxu0
        %v878 = vadd.f32 0.0, %v877
        %v879 = vpop.f32.mrb[0].mxu0
        %880 = vdwg.mxu0
        %881 = vmatprep.subr.mxu0 0.0
        %882 = vmatpush1.msra.mxu0 %v432
        %883 = vmatprep.subr.mxu0 0.0
        %884 = vmatpush1.msra.mxu0 %v433
        %885 = vmatprep.subr.mxu0 0.0
        %886 = vmatpush1.msra.mxu0 %v434
        %887 = vmatprep.subr.mxu0 0.0
        %888 = vmatpush1.msra.mxu0 %v435
        %889 = vmatprep.subr.mxu0 0.0
        %890 = vmatpush1.msra.mxu0 0.0
        %891 = vmatprep.subr.mxu0 0.0
        %892 = vmatpush1.msra.mxu0 0.0
        %893 = vmatprep.subr.mxu0 0.0
        %894 = vmatpush1.msra.mxu0 0.0
        %895 = vmatprep.subr.mxu0 0.0
        %896 = vmatpush1.msra.mxu0 0.0
        %897 = vmatprep.subr.mxu0 0.0
        %898 = vmatpush1.msra.mxu0 0.0
        %899 = vmatprep.subr.mxu0 0.0
        %900 = vmatpush1.msra.mxu0 0.0
        %901 = vmatprep.subr.mxu0 0.0
        %902 = vmatpush1.msra.mxu0 0.0
        %903 = vmatprep.subr.mxu0 0.0
        %904 = vmatpush1.msra.mxu0 0.0
        %905 = vmatprep.subr.mxu0 0.0
        %906 = vmatpush1.msra.mxu0 0.0
        %907 = vmatprep.subr.mxu0 0.0
        %908 = vmatpush1.msra.mxu0 0.0
        %909 = vmatprep.subr.mxu0 0.0
        %910 = vmatpush1.msra.mxu0 0.0
        %911 = vmatprep.subr.mxu0 0.0
        %912 = vmatpush1.msra.mxu0 0.0
        %913 = vmatprep.subr.mxu0 0.0
        %914 = vmatpush1.msra.mxu0 0.0
        %915 = vmatprep.subr.mxu0 0.0
        %916 = vmatpush1.msra.mxu0 0.0
        %917 = vmatprep.subr.mxu0 0.0
        %918 = vmatpush1.msra.mxu0 0.0
        %919 = vmatprep.subr.mxu0 0.0
        %920 = vmatpush1.msra.mxu0 0.0
        %921 = vmatprep.subr.mxu0 0.0
        %922 = vmatpush1.msra.mxu0 0.0
        %923 = vmatprep.subr.mxu0 0.0
        %924 = vmatpush1.msra.mxu0 0.0
        %925 = vmatprep.subr.mxu0 0.0
        %926 = vmatpush1.msra.mxu0 0.0
        %927 = vmatprep.subr.mxu0 0.0
        %928 = vmatpush1.msra.mxu0 0.0
        %929 = vmatprep.subr.mxu0 0.0
        %930 = vmatpush1.msra.mxu0 0.0
        %931 = vmatprep.subr.mxu0 0.0
        %932 = vmatpush1.msra.mxu0 0.0
        %933 = vmatprep.subr.mxu0 0.0
        %934 = vmatpush1.msra.mxu0 0.0
        %935 = vmatprep.subr.mxu0 0.0
        %936 = vmatpush1.msra.mxu0 0.0
        %937 = vmatprep.subr.mxu0 0.0
        %938 = vmatpush1.msra.mxu0 0.0
        %939 = vmatprep.subr.mxu0 0.0
        %940 = vmatpush1.msra.mxu0 0.0
        %941 = vmatprep.subr.mxu0 0.0
        %942 = vmatpush1.msra.mxu0 0.0
        %943 = vmatprep.subr.mxu0 0.0
        %944 = vmatpush1.msra.mxu0 0.0
        %945 = vmatprep.mubr.f32.mxu0 0.0
        %946 = vmatmul.mubr.f32.gmra.mrb[0].mxu0 %v459
        %v947 = vpop.f32.mrb[0].mxu0
        %v948 = vadd.f32 0.0, %v947
        %v949 = vpop.f32.mrb[0].mxu0
        %950 = vdwg.mxu0
        %951 = vmatprep.subr.mxu0 0.0
        %952 = vmatpush1.msra.mxu0 %v436
        %953 = vmatprep.subr.mxu0 0.0
        %954 = vmatpush1.msra.mxu0 %v437
        %955 = vmatprep.subr.mxu0 0.0
        %956 = vmatpush1.msra.mxu0 %v438
        %957 = vmatprep.subr.mxu0 0.0
        %958 = vmatpush1.msra.mxu0 %v439
        %959 = vmatprep.subr.mxu0 0.0
        %960 = vmatpush1.msra.mxu0 0.0
        %961 = vmatprep.subr.mxu0 0.0
        %962 = vmatpush1.msra.mxu0 0.0
        %963 = vmatprep.subr.mxu0 0.0
        %964 = vmatpush1.msra.mxu0 0.0
        %965 = vmatprep.subr.mxu0 0.0
        %966 = vmatpush1.msra.mxu0 0.0
        %967 = vmatprep.subr.mxu0 0.0
        %968 = vmatpush1.msra.mxu0 0.0
        %969 = vmatprep.subr.mxu0 0.0
        %970 = vmatpush1.msra.mxu0 0.0
        %971 = vmatprep.subr.mxu0 0.0
        %972 = vmatpush1.msra.mxu0 0.0
        %973 = vmatprep.subr.mxu0 0.0
        %974 = vmatpush1.msra.mxu0 0.0
        %975 = vmatprep.subr.mxu0 0.0
        %976 = vmatpush1.msra.mxu0 0.0
        %977 = vmatprep.subr.mxu0 0.0
        %978 = vmatpush1.msra.mxu0 0.0
        %979 = vmatprep.subr.mxu0 0.0
        %980 = vmatpush1.msra.mxu0 0.0
        %981 = vmatprep.subr.mxu0 0.0
        %982 = vmatpush1.msra.mxu0 0.0
        %983 = vmatprep.subr.mxu0 0.0
        %984 = vmatpush1.msra.mxu0 0.0
        %985 = vmatprep.subr.mxu0 0.0
        %986 = vmatpush1.msra.mxu0 0.0
        %987 = vmatprep.subr.mxu0 0.0
        %988 = vmatpush1.msra.mxu0 0.0
        %989 = vmatprep.subr.mxu0 0.0
        %990 = vmatpush1.msra.mxu0 0.0
        %991 = vmatprep.subr.mxu0 0.0
        %992 = vmatpush1.msra.mxu0 0.0
        %993 = vmatprep.subr.mxu0 0.0
        %994 = vmatpush1.msra.mxu0 0.0
        %995 = vmatprep.subr.mxu0 0.0
        %996 = vmatpush1.msra.mxu0 0.0
        %997 = vmatprep.subr.mxu0 0.0
        %998 = vmatpush1.msra.mxu0 0.0
        %999 = vmatprep.subr.mxu0 0.0
        %1000 = vmatpush1.msra.mxu0 0.0
        %1001 = vmatprep.subr.mxu0 0.0
        %1002 = vmatpush1.msra.mxu0 0.0
        %1003 = vmatprep.subr.mxu0 0.0
        %1004 = vmatpush1.msra.mxu0 0.0
        %1005 = vmatprep.subr.mxu0 0.0
        %1006 = vmatpush1.msra.mxu0 0.0
        %1007 = vmatprep.subr.mxu0 0.0
        %1008 = vmatpush1.msra.mxu0 0.0
        %1009 = vmatprep.subr.mxu0 0.0
        %1010 = vmatpush1.msra.mxu0 0.0
        %1011 = vmatprep.subr.mxu0 0.0
        %1012 = vmatpush1.msra.mxu0 0.0
        %1013 = vmatprep.subr.mxu0 0.0
        %1014 = vmatpush1.msra.mxu0 0.0
        %1015 = vmatprep.mubr.f32.mxu0 0.0
        %1016 = vmatmul.mubr.f32.gmra.mrb[0].mxu0 %v459
        %v1017 = vpop.f32.mrb[0].mxu0
        %v1018 = vadd.f32 0.0, %v1017
        %v1019 = vpop.f32.mrb[0].mxu0
        %1020 = vdwg.mxu0
        %1021 = vmatprep.subr.mxu0 0.0
        %1022 = vmatpush1.msra.mxu0 %v441
        %1023 = vmatprep.subr.mxu0 0.0
        %1024 = vmatpush1.msra.mxu0 %v442
        %1025 = vmatprep.subr.mxu0 0.0
        %1026 = vmatpush1.msra.mxu0 %v443
        %1027 = vmatprep.subr.mxu0 0.0
        %1028 = vmatpush1.msra.mxu0 %v444
        %1029 = vmatprep.subr.mxu0 0.0
        %1030 = vmatpush1.msra.mxu0 0.0
        %1031 = vmatprep.subr.mxu0 0.0
        %1032 = vmatpush1.msra.mxu0 0.0
        %1033 = vmatprep.subr.mxu0 0.0
        %1034 = vmatpush1.msra.mxu0 0.0
        %1035 = vmatprep.subr.mxu0 0.0
        %1036 = vmatpush1.msra.mxu0 0.0
        %1037 = vmatprep.subr.mxu0 0.0
        %1038 = vmatpush1.msra.mxu0 0.0
        %1039 = vmatprep.subr.mxu0 0.0
        %1040 = vmatpush1.msra.mxu0 0.0
        %1041 = vmatprep.subr.mxu0 0.0
        %1042 = vmatpush1.msra.mxu0 0.0
        %1043 = vmatprep.subr.mxu0 0.0
        %1044 = vmatpush1.msra.mxu0 0.0
        %1045 = vmatprep.subr.mxu0 0.0
        %1046 = vmatpush1.msra.mxu0 0.0
        %1047 = vmatprep.subr.mxu0 0.0
        %1048 = vmatpush1.msra.mxu0 0.0
        %1049 = vmatprep.subr.mxu0 0.0
        %1050 = vmatpush1.msra.mxu0 0.0
        %1051 = vmatprep.subr.mxu0 0.0
        %1052 = vmatpush1.msra.mxu0 0.0
        %1053 = vmatprep.subr.mxu0 0.0
        %1054 = vmatpush1.msra.mxu0 0.0
        %1055 = vmatprep.subr.mxu0 0.0
        %1056 = vmatpush1.msra.mxu0 0.0
        %1057 = vmatprep.subr.mxu0 0.0
        %1058 = vmatpush1.msra.mxu0 0.0
        %1059 = vmatprep.subr.mxu0 0.0
        %1060 = vmatpush1.msra.mxu0 0.0
        %1061 = vmatprep.subr.mxu0 0.0
        %1062 = vmatpush1.msra.mxu0 0.0
        %1063 = vmatprep.subr.mxu0 0.0
        %1064 = vmatpush1.msra.mxu0 0.0
        %1065 = vmatprep.subr.mxu0 0.0
        %1066 = vmatpush1.msra.mxu0 0.0
        %1067 = vmatprep.subr.mxu0 0.0
        %1068 = vmatpush1.msra.mxu0 0.0
        %1069 = vmatprep.subr.mxu0 0.0
        %1070 = vmatpush1.msra.mxu0 0.0
        %1071 = vmatprep.subr.mxu0 0.0
        %1072 = vmatpush1.msra.mxu0 0.0
        %1073 = vmatprep.subr.mxu0 0.0
        %1074 = vmatpush1.msra.mxu0 0.0
        %1075 = vmatprep.subr.mxu0 0.0
        %1076 = vmatpush1.msra.mxu0 0.0
        %1077 = vmatprep.subr.mxu0 0.0
        %1078 = vmatpush1.msra.mxu0 0.0
        %1079 = vmatprep.subr.mxu0 0.0
        %1080 = vmatpush1.msra.mxu0 0.0
        %1081 = vmatprep.subr.mxu0 0.0
        %1082 = vmatpush1.msra.mxu0 0.0
        %1083 = vmatprep.subr.mxu0 0.0
        %1084 = vmatpush1.msra.mxu0 0.0
        %1085 = vmatprep.mubr.f32.mxu0 0.0
        %1086 = vmatmul.mubr.f32.gmra.mrb[0].mxu0 %v459
        %v1087 = vpop.f32.mrb[0].mxu0
        %v1088 = vadd.f32 0.0, %v1087
        %v1089 = vpop.f32.mrb[0].mxu0
        %1090 = vdwg.mxu0
        %1091 = vmatprep.subr.mxu0 0.0
        %1092 = vmatpush1.msra.mxu0 %v445
        %1093 = vmatprep.subr.mxu0 0.0
        %1094 = vmatpush1.msra.mxu0 %v446
        %1095 = vmatprep.subr.mxu0 0.0
        %1096 = vmatpush1.msra.mxu0 %v447
        %1097 = vmatprep.subr.mxu0 0.0
        %1098 = vmatpush1.msra.mxu0 %v448
        %1099 = vmatprep.subr.mxu0 0.0
        %1100 = vmatpush1.msra.mxu0 0.0
        %1101 = vmatprep.subr.mxu0 0.0
        %1102 = vmatpush1.msra.mxu0 0.0
        %1103 = vmatprep.subr.mxu0 0.0
        %1104 = vmatpush1.msra.mxu0 0.0
        %1105 = vmatprep.subr.mxu0 0.0
        %1106 = vmatpush1.msra.mxu0 0.0
        %1107 = vmatprep.subr.mxu0 0.0
        %1108 = vmatpush1.msra.mxu0 0.0
        %1109 = vmatprep.subr.mxu0 0.0
        %1110 = vmatpush1.msra.mxu0 0.0
        %1111 = vmatprep.subr.mxu0 0.0
        %1112 = vmatpush1.msra.mxu0 0.0
        %1113 = vmatprep.subr.mxu0 0.0
        %1114 = vmatpush1.msra.mxu0 0.0
        %1115 = vmatprep.subr.mxu0 0.0
        %1116 = vmatpush1.msra.mxu0 0.0
        %1117 = vmatprep.subr.mxu0 0.0
        %1118 = vmatpush1.msra.mxu0 0.0
        %1119 = vmatprep.subr.mxu0 0.0
        %1120 = vmatpush1.msra.mxu0 0.0
        %1121 = vmatprep.subr.mxu0 0.0
        %1122 = vmatpush1.msra.mxu0 0.0
        %1123 = vmatprep.subr.mxu0 0.0
        %1124 = vmatpush1.msra.mxu0 0.0
        %1125 = vmatprep.subr.mxu0 0.0
        %1126 = vmatpush1.msra.mxu0 0.0
        %1127 = vmatprep.subr.mxu0 0.0
        %1128 = vmatpush1.msra.mxu0 0.0
        %1129 = vmatprep.subr.mxu0 0.0
        %1130 = vmatpush1.msra.mxu0 0.0
        %1131 = vmatprep.subr.mxu0 0.0
        %1132 = vmatpush1.msra.mxu0 0.0
        %1133 = vmatprep.subr.mxu0 0.0
        %1134 = vmatpush1.msra.mxu0 0.0
        %1135 = vmatprep.subr.mxu0 0.0
        %1136 = vmatpush1.msra.mxu0 0.0
        %1137 = vmatprep.subr.mxu0 0.0
        %1138 = vmatpush1.msra.mxu0 0.0
        %1139 = vmatprep.subr.mxu0 0.0
        %1140 = vmatpush1.msra.mxu0 0.0
        %1141 = vmatprep.subr.mxu0 0.0
        %1142 = vmatpush1.msra.mxu0 0.0
        %1143 = vmatprep.subr.mxu0 0.0
        %1144 = vmatpush1.msra.mxu0 0.0
        %1145 = vmatprep.subr.mxu0 0.0
        %1146 = vmatpush1.msra.mxu0 0.0
        %1147 = vmatprep.subr.mxu0 0.0
        %1148 = vmatpush1.msra.mxu0 0.0
        %1149 = vmatprep.subr.mxu0 0.0
        %1150 = vmatpush1.msra.mxu0 0.0
        %1151 = vmatprep.subr.mxu0 0.0
        %1152 = vmatpush1.msra.mxu0 0.0
        %1153 = vmatprep.subr.mxu0 0.0
        %1154 = vmatpush1.msra.mxu0 0.0
        %1155 = vmatprep.mubr.f32.mxu0 0.0
        %1156 = vmatmul.mubr.f32.gmra.mrb[0].mxu0 %v459
        %v1157 = vpop.f32.mrb[0].mxu0
        %v1158 = vadd.f32 0.0, %v1157
        %v1159 = vpop.f32.mrb[0].mxu0
        %1160 = vdwg.mxu0
        %1161 = vmatprep.subr.mxu0 0.0
        %1162 = vmatpush1.msra.mxu0 %v449
        %1163 = vmatprep.subr.mxu0 0.0
        %1164 = vmatpush1.msra.mxu0 %v450
        %1165 = vmatprep.subr.mxu0 0.0
        %1166 = vmatpush1.msra.mxu0 %v451
        %1167 = vmatprep.subr.mxu0 0.0
        %1168 = vmatpush1.msra.mxu0 %v452
        %1169 = vmatprep.subr.mxu0 0.0
        %1170 = vmatpush1.msra.mxu0 0.0
        %1171 = vmatprep.subr.mxu0 0.0
        %1172 = vmatpush1.msra.mxu0 0.0
        %1173 = vmatprep.subr.mxu0 0.0
        %1174 = vmatpush1.msra.mxu0 0.0
        %1175 = vmatprep.subr.mxu0 0.0
        %1176 = vmatpush1.msra.mxu0 0.0
        %1177 = vmatprep.subr.mxu0 0.0
        %1178 = vmatpush1.msra.mxu0 0.0
        %1179 = vmatprep.subr.mxu0 0.0
        %1180 = vmatpush1.msra.mxu0 0.0
        %1181 = vmatprep.subr.mxu0 0.0
        %1182 = vmatpush1.msra.mxu0 0.0
        %1183 = vmatprep.subr.mxu0 0.0
        %1184 = vmatpush1.msra.mxu0 0.0
        %1185 = vmatprep.subr.mxu0 0.0
        %1186 = vmatpush1.msra.mxu0 0.0
        %1187 = vmatprep.subr.mxu0 0.0
        %1188 = vmatpush1.msra.mxu0 0.0
        %1189 = vmatprep.subr.mxu0 0.0
        %1190 = vmatpush1.msra.mxu0 0.0
        %1191 = vmatprep.subr.mxu0 0.0
        %1192 = vmatpush1.msra.mxu0 0.0
        %1193 = vmatprep.subr.mxu0 0.0
        %1194 = vmatpush1.msra.mxu0 0.0
        %1195 = vmatprep.subr.mxu0 0.0
        %1196 = vmatpush1.msra.mxu0 0.0
        %1197 = vmatprep.subr.mxu0 0.0
        %1198 = vmatpush1.msra.mxu0 0.0
        %1199 = vmatprep.subr.mxu0 0.0
        %1200 = vmatpush1.msra.mxu0 0.0
        %1201 = vmatprep.subr.mxu0 0.0
        %1202 = vmatpush1.msra.mxu0 0.0
        %1203 = vmatprep.subr.mxu0 0.0
        %1204 = vmatpush1.msra.mxu0 0.0
        %1205 = vmatprep.subr.mxu0 0.0
        %1206 = vmatpush1.msra.mxu0 0.0
        %1207 = vmatprep.subr.mxu0 0.0
        %1208 = vmatpush1.msra.mxu0 0.0
        %1209 = vmatprep.subr.mxu0 0.0
        %1210 = vmatpush1.msra.mxu0 0.0
        %1211 = vmatprep.subr.mxu0 0.0
        %1212 = vmatpush1.msra.mxu0 0.0
        %1213 = vmatprep.subr.mxu0 0.0
        %1214 = vmatpush1.msra.mxu0 0.0
        %1215 = vmatprep.subr.mxu0 0.0
        %1216 = vmatpush1.msra.mxu0 0.0
        %1217 = vmatprep.subr.mxu0 0.0
        %1218 = vmatpush1.msra.mxu0 0.0
        %1219 = vmatprep.subr.mxu0 0.0
        %1220 = vmatpush1.msra.mxu0 0.0
        %1221 = vmatprep.subr.mxu0 0.0
        %1222 = vmatpush1.msra.mxu0 0.0
        %1223 = vmatprep.subr.mxu0 0.0
        %1224 = vmatpush1.msra.mxu0 0.0
        %1225 = vmatprep.mubr.f32.mxu0 0.0
        %1226 = vmatmul.mubr.f32.gmra.mrb[0].mxu0 %v459
        %v1227 = vpop.f32.mrb[0].mxu0
        %v1228 = vadd.f32 0.0, %v1227
        %v1229 = vpop.f32.mrb[0].mxu0
        %1230 = vdwg.mxu0
        %1231 = vmatprep.subr.mxu0 0.0
        %1232 = vmatpush1.msra.mxu0 %v453
        %1233 = vmatprep.subr.mxu0 0.0
        %1234 = vmatpush1.msra.mxu0 %v454
        %1235 = vmatprep.subr.mxu0 0.0
        %1236 = vmatpush1.msra.mxu0 %v455
        %1237 = vmatprep.subr.mxu0 0.0
        %1238 = vmatpush1.msra.mxu0 %v456
        %1239 = vmatprep.subr.mxu0 0.0
        %1240 = vmatpush1.msra.mxu0 0.0
        %1241 = vmatprep.subr.mxu0 0.0
        %1242 = vmatpush1.msra.mxu0 0.0
        %1243 = vmatprep.subr.mxu0 0.0
        %1244 = vmatpush1.msra.mxu0 0.0
        %1245 = vmatprep.subr.mxu0 0.0
        %1246 = vmatpush1.msra.mxu0 0.0
        %1247 = vmatprep.subr.mxu0 0.0
        %1248 = vmatpush1.msra.mxu0 0.0
        %1249 = vmatprep.subr.mxu0 0.0
        %1250 = vmatpush1.msra.mxu0 0.0
        %1251 = vmatprep.subr.mxu0 0.0
        %1252 = vmatpush1.msra.mxu0 0.0
        %1253 = vmatprep.subr.mxu0 0.0
        %1254 = vmatpush1.msra.mxu0 0.0
        %1255 = vmatprep.subr.mxu0 0.0
        %1256 = vmatpush1.msra.mxu0 0.0
        %1257 = vmatprep.subr.mxu0 0.0
        %1258 = vmatpush1.msra.mxu0 0.0
        %1259 = vmatprep.subr.mxu0 0.0
        %1260 = vmatpush1.msra.mxu0 0.0
        %1261 = vmatprep.subr.mxu0 0.0
        %1262 = vmatpush1.msra.mxu0 0.0
        %1263 = vmatprep.subr.mxu0 0.0
        %1264 = vmatpush1.msra.mxu0 0.0
        %1265 = vmatprep.subr.mxu0 0.0
        %1266 = vmatpush1.msra.mxu0 0.0
        %1267 = vmatprep.subr.mxu0 0.0
        %1268 = vmatpush1.msra.mxu0 0.0
        %1269 = vmatprep.subr.mxu0 0.0
        %1270 = vmatpush1.msra.mxu0 0.0
        %1271 = vmatprep.subr.mxu0 0.0
        %1272 = vmatpush1.msra.mxu0 0.0
        %1273 = vmatprep.subr.mxu0 0.0
        %1274 = vmatpush1.msra.mxu0 0.0
        %1275 = vmatprep.subr.mxu0 0.0
        %1276 = vmatpush1.msra.mxu0 0.0
        %1277 = vmatprep.subr.mxu0 0.0
        %1278 = vmatpush1.msra.mxu0 0.0
        %1279 = vmatprep.subr.mxu0 0.0
        %1280 = vmatpush1.msra.mxu0 0.0
        %1281 = vmatprep.subr.mxu0 0.0
        %1282 = vmatpush1.msra.mxu0 0.0
        %1283 = vmatprep.subr.mxu0 0.0
        %1284 = vmatpush1.msra.mxu0 0.0
        %1285 = vmatprep.subr.mxu0 0.0
        %1286 = vmatpush1.msra.mxu0 0.0
        %1287 = vmatprep.subr.mxu0 0.0
        %1288 = vmatpush1.msra.mxu0 0.0
        %1289 = vmatprep.subr.mxu0 0.0
        %1290 = vmatpush1.msra.mxu0 0.0
        %1291 = vmatprep.subr.mxu0 0.0
        %1292 = vmatpush1.msra.mxu0 0.0
        %1293 = vmatprep.subr.mxu0 0.0
        %1294 = vmatpush1.msra.mxu0 0.0
        %1295 = vmatprep.mubr.f32.mxu0 0.0
        %1296 = vmatmul.mubr.f32.gmra.mrb[0].mxu0 %v459
        %v1297 = vpop.f32.mrb[0].mxu0
        %v1298 = vadd.f32 0.0, %v1297
        %v1299 = vpop.f32.mrb[0].mxu0
        %1300 = vdwg.mxu0
        %vm1301 = vcmask 130048
        %v1303 = vsel %vm1301, %v528, 0
        %v1306 = vsel %vm1301, %v808, 0
        %1308 = vmatprep.subr.mxu0 0.0
        %1309 = vmatpush1.xpose.msra.mxu0 %v1306
        %1310 = vmatprep.subr.mxu0 0.0
        %1311 = vmatpush1.xpose.msra.mxu0 0.0
        %1312 = vmatprep.subr.mxu0 0.0
        %1313 = vmatpush1.xpose.msra.mxu0 0.0
        %1314 = vmatprep.subr.mxu0 0.0
        %1315 = vmatpush1.xpose.msra.mxu0 0.0
        %1316 = vmatprep.subr.mxu0 0.0
        %1317 = vmatpush1.xpose.msra.mxu0 0.0
        %1318 = vmatprep.subr.mxu0 0.0
        %1319 = vmatpush1.xpose.msra.mxu0 0.0
        %1320 = vmatprep.subr.mxu0 0.0
        %1321 = vmatpush1.xpose.msra.mxu0 0.0
        %1322 = vmatprep.subr.mxu0 0.0
        %1323 = vmatpush1.xpose.msra.mxu0 0.0
        %1324 = vmatprep.subr.mxu0 0.0
        %1325 = vmatpush1.xpose.msra.mxu0 0.0
        %1326 = vmatprep.subr.mxu0 0.0
        %1327 = vmatpush1.xpose.msra.mxu0 0.0
        %1328 = vmatprep.subr.mxu0 0.0
        %1329 = vmatpush1.xpose.msra.mxu0 0.0
        %1330 = vmatprep.subr.mxu0 0.0
        %1331 = vmatpush1.xpose.msra.mxu0 0.0
        %1332 = vmatprep.subr.mxu0 0.0
        %1333 = vmatpush1.xpose.msra.mxu0 0.0
        %1334 = vmatprep.subr.mxu0 0.0
        %1335 = vmatpush1.xpose.msra.mxu0 0.0
        %1336 = vmatprep.subr.mxu0 0.0
        %1337 = vmatpush1.xpose.msra.mxu0 0.0
        %1338 = vmatprep.subr.mxu0 0.0
        %1339 = vmatpush1.xpose.msra.mxu0 0.0
        %1340 = vmatprep.subr.mxu0 0.0
        %1341 = vmatpush1.xpose.msra.mxu0 0.0
        %1342 = vmatprep.subr.mxu0 0.0
        %1343 = vmatpush1.xpose.msra.mxu0 0.0
        %1344 = vmatprep.subr.mxu0 0.0
        %1345 = vmatpush1.xpose.msra.mxu0 0.0
        %1346 = vmatprep.subr.mxu0 0.0
        %1347 = vmatpush1.xpose.msra.mxu0 0.0
        %1348 = vmatprep.subr.mxu0 0.0
        %1349 = vmatpush1.xpose.msra.mxu0 0.0
        %1350 = vmatprep.subr.mxu0 0.0
        %1351 = vmatpush1.xpose.msra.mxu0 0.0
        %1352 = vmatprep.subr.mxu0 0.0
        %1353 = vmatpush1.xpose.msra.mxu0 0.0
        %1354 = vmatprep.subr.mxu0 0.0
        %1355 = vmatpush1.xpose.msra.mxu0 0.0
        %1356 = vmatprep.subr.mxu0 0.0
        %1357 = vmatpush1.xpose.msra.mxu0 0.0
        %1358 = vmatprep.subr.mxu0 0.0
        %1359 = vmatpush1.xpose.msra.mxu0 0.0
        %1360 = vmatprep.subr.mxu0 0.0
        %1361 = vmatpush1.xpose.msra.mxu0 0.0
        %1362 = vmatprep.subr.mxu0 0.0
        %1363 = vmatpush1.xpose.msra.mxu0 0.0
        %1364 = vmatprep.subr.mxu0 0.0
        %1365 = vmatpush1.xpose.msra.mxu0 0.0
        %1366 = vmatprep.subr.mxu0 0.0
        %1367 = vmatpush1.xpose.msra.mxu0 0.0
        %1368 = vmatprep.subr.mxu0 0.0
        %1369 = vmatpush1.xpose.msra.mxu0 0.0
        %1370 = vmatprep.subr.mxu0 0.0
        %1371 = vmatpush1.xpose.msra.mxu0 0.0
        %1372 = vmatprep.mubr.f32.mxu0 0.0
        %1373 = vmatmul.mubr.f32.gmra.mrb[0].mxu0 %v1303
        %v1374 = vpop.f32.mrb[0].mxu0
        %v1375 = vadd.f32 0.0, %v1374
        %v1376 = vpop.f32.mrb[0].mxu0
        %1377 = vdwg.mxu0
        %v1379 = vsel %vm1301, %v598, 0
        %v1382 = vsel %vm1301, %v878, 0
        %1384 = vmatprep.subr.mxu0 0.0
        %1385 = vmatpush1.xpose.msra.mxu0 %v1382
        %1386 = vmatprep.subr.mxu0 0.0
        %1387 = vmatpush1.xpose.msra.mxu0 0.0
        %1388 = vmatprep.subr.mxu0 0.0
        %1389 = vmatpush1.xpose.msra.mxu0 0.0
        %1390 = vmatprep.subr.mxu0 0.0
        %1391 = vmatpush1.xpose.msra.mxu0 0.0
        %1392 = vmatprep.subr.mxu0 0.0
        %1393 = vmatpush1.xpose.msra.mxu0 0.0
        %1394 = vmatprep.subr.mxu0 0.0
        %1395 = vmatpush1.xpose.msra.mxu0 0.0
        %1396 = vmatprep.subr.mxu0 0.0
        %1397 = vmatpush1.xpose.msra.mxu0 0.0
        %1398 = vmatprep.subr.mxu0 0.0
        %1399 = vmatpush1.xpose.msra.mxu0 0.0
        %1400 = vmatprep.subr.mxu0 0.0
        %1401 = vmatpush1.xpose.msra.mxu0 0.0
        %1402 = vmatprep.subr.mxu0 0.0
        %1403 = vmatpush1.xpose.msra.mxu0 0.0
        %1404 = vmatprep.subr.mxu0 0.0
        %1405 = vmatpush1.xpose.msra.mxu0 0.0
        %1406 = vmatprep.subr.mxu0 0.0
        %1407 = vmatpush1.xpose.msra.mxu0 0.0
        %1408 = vmatprep.subr.mxu0 0.0
        %1409 = vmatpush1.xpose.msra.mxu0 0.0
        %1410 = vmatprep.subr.mxu0 0.0
        %1411 = vmatpush1.xpose.msra.mxu0 0.0
        %1412 = vmatprep.subr.mxu0 0.0
        %1413 = vmatpush1.xpose.msra.mxu0 0.0
        %1414 = vmatprep.subr.mxu0 0.0
        %1415 = vmatpush1.xpose.msra.mxu0 0.0
        %1416 = vmatprep.subr.mxu0 0.0
        %1417 = vmatpush1.xpose.msra.mxu0 0.0
        %1418 = vmatprep.subr.mxu0 0.0
        %1419 = vmatpush1.xpose.msra.mxu0 0.0
        %1420 = vmatprep.subr.mxu0 0.0
        %1421 = vmatpush1.xpose.msra.mxu0 0.0
        %1422 = vmatprep.subr.mxu0 0.0
        %1423 = vmatpush1.xpose.msra.mxu0 0.0
        %1424 = vmatprep.subr.mxu0 0.0
        %1425 = vmatpush1.xpose.msra.mxu0 0.0
        %1426 = vmatprep.subr.mxu0 0.0
        %1427 = vmatpush1.xpose.msra.mxu0 0.0
        %1428 = vmatprep.subr.mxu0 0.0
        %1429 = vmatpush1.xpose.msra.mxu0 0.0
        %1430 = vmatprep.subr.mxu0 0.0
        %1431 = vmatpush1.xpose.msra.mxu0 0.0
        %1432 = vmatprep.subr.mxu0 0.0
        %1433 = vmatpush1.xpose.msra.mxu0 0.0
        %1434 = vmatprep.subr.mxu0 0.0
        %1435 = vmatpush1.xpose.msra.mxu0 0.0
        %1436 = vmatprep.subr.mxu0 0.0
        %1437 = vmatpush1.xpose.msra.mxu0 0.0
        %1438 = vmatprep.subr.mxu0 0.0
        %1439 = vmatpush1.xpose.msra.mxu0 0.0
        %1440 = vmatprep.subr.mxu0 0.0
        %1441 = vmatpush1.xpose.msra.mxu0 0.0
        %1442 = vmatprep.subr.mxu0 0.0
        %1443 = vmatpush1.xpose.msra.mxu0 0.0
        %1444 = vmatprep.subr.mxu0 0.0
        %1445 = vmatpush1.xpose.msra.mxu0 0.0
        %1446 = vmatprep.subr.mxu0 0.0
        %1447 = vmatpush1.xpose.msra.mxu0 0.0
        %1448 = vmatprep.mubr.f32.mxu0 0.0
        %1449 = vmatmul.mubr.f32.gmra.mrb[0].mxu0 %v1379
        %v1450 = vpop.f32.mrb[0].mxu0
        %v1451 = vadd.f32 0.0, %v1450
        %v1452 = vpop.f32.mrb[0].mxu0
        %1453 = vdwg.mxu0
        %v1455 = vsel %vm1301, %v668, 0
        %v1458 = vsel %vm1301, %v948, 0
        %1460 = vmatprep.subr.mxu0 0.0
        %1461 = vmatpush1.xpose.msra.mxu0 %v1458
        %1462 = vmatprep.subr.mxu0 0.0
        %1463 = vmatpush1.xpose.msra.mxu0 0.0
        %1464 = vmatprep.subr.mxu0 0.0
        %1465 = vmatpush1.xpose.msra.mxu0 0.0
        %1466 = vmatprep.subr.mxu0 0.0
        %1467 = vmatpush1.xpose.msra.mxu0 0.0
        %1468 = vmatprep.subr.mxu0 0.0
        %1469 = vmatpush1.xpose.msra.mxu0 0.0
        %1470 = vmatprep.subr.mxu0 0.0
        %1471 = vmatpush1.xpose.msra.mxu0 0.0
        %1472 = vmatprep.subr.mxu0 0.0
        %1473 = vmatpush1.xpose.msra.mxu0 0.0
        %1474 = vmatprep.subr.mxu0 0.0
        %1475 = vmatpush1.xpose.msra.mxu0 0.0
        %1476 = vmatprep.subr.mxu0 0.0
        %1477 = vmatpush1.xpose.msra.mxu0 0.0
        %1478 = vmatprep.subr.mxu0 0.0
        %1479 = vmatpush1.xpose.msra.mxu0 0.0
        %1480 = vmatprep.subr.mxu0 0.0
        %1481 = vmatpush1.xpose.msra.mxu0 0.0
        %1482 = vmatprep.subr.mxu0 0.0
        %1483 = vmatpush1.xpose.msra.mxu0 0.0
        %1484 = vmatprep.subr.mxu0 0.0
        %1485 = vmatpush1.xpose.msra.mxu0 0.0
        %1486 = vmatprep.subr.mxu0 0.0
        %1487 = vmatpush1.xpose.msra.mxu0 0.0
        %1488 = vmatprep.subr.mxu0 0.0
        %1489 = vmatpush1.xpose.msra.mxu0 0.0
        %1490 = vmatprep.subr.mxu0 0.0
        %1491 = vmatpush1.xpose.msra.mxu0 0.0
        %1492 = vmatprep.subr.mxu0 0.0
        %1493 = vmatpush1.xpose.msra.mxu0 0.0
        %1494 = vmatprep.subr.mxu0 0.0
        %1495 = vmatpush1.xpose.msra.mxu0 0.0
        %1496 = vmatprep.subr.mxu0 0.0
        %1497 = vmatpush1.xpose.msra.mxu0 0.0
        %1498 = vmatprep.subr.mxu0 0.0
        %1499 = vmatpush1.xpose.msra.mxu0 0.0
        %1500 = vmatprep.subr.mxu0 0.0
        %1501 = vmatpush1.xpose.msra.mxu0 0.0
        %1502 = vmatprep.subr.mxu0 0.0
        %1503 = vmatpush1.xpose.msra.mxu0 0.0
        %1504 = vmatprep.subr.mxu0 0.0
        %1505 = vmatpush1.xpose.msra.mxu0 0.0
        %1506 = vmatprep.subr.mxu0 0.0
        %1507 = vmatpush1.xpose.msra.mxu0 0.0
        %1508 = vmatprep.subr.mxu0 0.0
        %1509 = vmatpush1.xpose.msra.mxu0 0.0
        %1510 = vmatprep.subr.mxu0 0.0
        %1511 = vmatpush1.xpose.msra.mxu0 0.0
        %1512 = vmatprep.subr.mxu0 0.0
        %1513 = vmatpush1.xpose.msra.mxu0 0.0
        %1514 = vmatprep.subr.mxu0 0.0
        %1515 = vmatpush1.xpose.msra.mxu0 0.0
        %1516 = vmatprep.subr.mxu0 0.0
        %1517 = vmatpush1.xpose.msra.mxu0 0.0
        %1518 = vmatprep.subr.mxu0 0.0
        %1519 = vmatpush1.xpose.msra.mxu0 0.0
        %1520 = vmatprep.subr.mxu0 0.0
        %1521 = vmatpush1.xpose.msra.mxu0 0.0
        %1522 = vmatprep.subr.mxu0 0.0
        %1523 = vmatpush1.xpose.msra.mxu0 0.0
        %1524 = vmatprep.mubr.f32.mxu0 0.0
        %1525 = vmatmul.mubr.f32.gmra.mrb[0].mxu0 %v1455
        %v1526 = vpop.f32.mrb[0].mxu0
        %v1527 = vadd.f32 0.0, %v1526
        %v1528 = vpop.f32.mrb[0].mxu0
        %1529 = vdwg.mxu0
        %v1531 = vsel %vm1301, %v738, 0
        %v1534 = vsel %vm1301, %v1018, 0
        %1536 = vmatprep.subr.mxu0 0.0
        %1537 = vmatpush1.xpose.msra.mxu0 %v1534
        %1538 = vmatprep.subr.mxu0 0.0
        %1539 = vmatpush1.xpose.msra.mxu0 0.0
        %1540 = vmatprep.subr.mxu0 0.0
        %1541 = vmatpush1.xpose.msra.mxu0 0.0
        %1542 = vmatprep.subr.mxu0 0.0
        %1543 = vmatpush1.xpose.msra.mxu0 0.0
        %1544 = vmatprep.subr.mxu0 0.0
        %1545 = vmatpush1.xpose.msra.mxu0 0.0
        %1546 = vmatprep.subr.mxu0 0.0
        %1547 = vmatpush1.xpose.msra.mxu0 0.0
        %1548 = vmatprep.subr.mxu0 0.0
        %1549 = vmatpush1.xpose.msra.mxu0 0.0
        %1550 = vmatprep.subr.mxu0 0.0
        %1551 = vmatpush1.xpose.msra.mxu0 0.0
        %1552 = vmatprep.subr.mxu0 0.0
        %1553 = vmatpush1.xpose.msra.mxu0 0.0
        %1554 = vmatprep.subr.mxu0 0.0
        %1555 = vmatpush1.xpose.msra.mxu0 0.0
        %1556 = vmatprep.subr.mxu0 0.0
        %1557 = vmatpush1.xpose.msra.mxu0 0.0
        %1558 = vmatprep.subr.mxu0 0.0
        %1559 = vmatpush1.xpose.msra.mxu0 0.0
        %1560 = vmatprep.subr.mxu0 0.0
        %1561 = vmatpush1.xpose.msra.mxu0 0.0
        %1562 = vmatprep.subr.mxu0 0.0
        %1563 = vmatpush1.xpose.msra.mxu0 0.0
        %1564 = vmatprep.subr.mxu0 0.0
        %1565 = vmatpush1.xpose.msra.mxu0 0.0
        %1566 = vmatprep.subr.mxu0 0.0
        %1567 = vmatpush1.xpose.msra.mxu0 0.0
        %1568 = vmatprep.subr.mxu0 0.0
        %1569 = vmatpush1.xpose.msra.mxu0 0.0
        %1570 = vmatprep.subr.mxu0 0.0
        %1571 = vmatpush1.xpose.msra.mxu0 0.0
        %1572 = vmatprep.subr.mxu0 0.0
        %1573 = vmatpush1.xpose.msra.mxu0 0.0
        %1574 = vmatprep.subr.mxu0 0.0
        %1575 = vmatpush1.xpose.msra.mxu0 0.0
        %1576 = vmatprep.subr.mxu0 0.0
        %1577 = vmatpush1.xpose.msra.mxu0 0.0
        %1578 = vmatprep.subr.mxu0 0.0
        %1579 = vmatpush1.xpose.msra.mxu0 0.0
        %1580 = vmatprep.subr.mxu0 0.0
        %1581 = vmatpush1.xpose.msra.mxu0 0.0
        %1582 = vmatprep.subr.mxu0 0.0
        %1583 = vmatpush1.xpose.msra.mxu0 0.0
        %1584 = vmatprep.subr.mxu0 0.0
        %1585 = vmatpush1.xpose.msra.mxu0 0.0
        %1586 = vmatprep.subr.mxu0 0.0
        %1587 = vmatpush1.xpose.msra.mxu0 0.0
        %1588 = vmatprep.subr.mxu0 0.0
        %1589 = vmatpush1.xpose.msra.mxu0 0.0
        %1590 = vmatprep.subr.mxu0 0.0
        %1591 = vmatpush1.xpose.msra.mxu0 0.0
        %1592 = vmatprep.subr.mxu0 0.0
        %1593 = vmatpush1.xpose.msra.mxu0 0.0
        %1594 = vmatprep.subr.mxu0 0.0
        %1595 = vmatpush1.xpose.msra.mxu0 0.0
        %1596 = vmatprep.subr.mxu0 0.0
        %1597 = vmatpush1.xpose.msra.mxu0 0.0
        %1598 = vmatprep.subr.mxu0 0.0
        %1599 = vmatpush1.xpose.msra.mxu0 0.0
        %1600 = vmatprep.mubr.f32.mxu0 0.0
        %1601 = vmatmul.mubr.f32.gmra.mrb[0].mxu0 %v1531
        %v1602 = vpop.f32.mrb[0].mxu0
        %v1603 = vadd.f32 0.0, %v1602
        %v1604 = vpop.f32.mrb[0].mxu0
        %1605 = vdwg.mxu0
        %vm1606 = vcmask 64512
        %v1607 = vsel %vm1606, %v1375, -inf
        %1608 = vmax.xlane.f32.xlu0 %v1607
        %v1609 = vpop.xlane.xlu0 %1608
        %v1610 = vsel %vm1606, %v1451, -inf
        %1611 = vmax.xlane.f32.xlu0 %v1610
        %v1612 = vpop.xlane.xlu0 %1611
        %v1613 = vsel %vm1606, %v1527, -inf
        %1614 = vmax.xlane.f32.xlu0 %v1613
        %v1615 = vpop.xlane.xlu0 %1614
        %v1616 = vsel %vm1606, %v1603, -inf
        %1617 = vmax.xlane.f32.xlu0 %v1616
        %v1618 = vpop.xlane.xlu0 %1617
        %v1619 = vsub.f32 %v1375, %v1609
        %v1620 = vsub.f32 %v1451, %v1612
        %v1621 = vsub.f32 %v1527, %v1615
        %v1622 = vsub.f32 %v1603, %v1618
        %v1623 = vmul.f32 %v1619, 1.442695
        %v1624 = vpow.pop %v1623
        %v1625 = vmul.f32 %v1620, 1.442695
        %v1626 = vpow.pop %v1625
        %v1627 = vmul.f32 %v1621, 1.442695
        %v1628 = vpow.pop %v1627
        %v1629 = vmul.f32 %v1622, 1.442695
        %v1630 = vpow.pop %v1629
        %v1631 = vsel %vm1606, %v1624, 0.0
        %1632 = vadd.xlane.f32.xlu0 %v1631
        %v1633 = vpop.xlane.xlu0 %1632
        %v1634 = vsel %vm1606, %v1626, 0.0
        %1635 = vadd.xlane.f32.xlu0 %v1634
        %v1636 = vpop.xlane.xlu0 %1635
        %v1637 = vsel %vm1606, %v1628, 0.0
        %1638 = vadd.xlane.f32.xlu0 %v1637
        %v1639 = vpop.xlane.xlu0 %1638
        %v1640 = vsel %vm1606, %v1630, 0.0
        %1641 = vadd.xlane.f32.xlu0 %v1640
        %v1642 = vpop.xlane.xlu0 %1641
        %v1643 = vrcp.pop %v1633
        %v1644 = vrcp.pop %v1636
        %v1645 = vrcp.pop %v1639
        %v1646 = vrcp.pop %v1642
        %v1647 = vmul.f32 %v1633, %v1643
        %v1648 = vmul.f32 %v1636, %v1644
        %v1649 = vmul.f32 %v1639, %v1645
        %v1650 = vmul.f32 %v1642, %v1646
        %v1651 = vsub.f32 2.0, %v1647
        %v1652 = vsub.f32 2.0, %v1648
        %v1653 = vsub.f32 2.0, %v1649
        %v1654 = vsub.f32 2.0, %v1650
        %v1655 = vmul.f32 %v1643, %v1651
        %v1656 = vmul.f32 %v1644, %v1652
        %v1657 = vmul.f32 %v1645, %v1653
        %v1658 = vmul.f32 %v1646, %v1654
        %v1659 = vmul.f32 %v1624, %v1655
        %v1660 = vmul.f32 %v1626, %v1656
        %v1661 = vmul.f32 %v1628, %v1657
        %v1662 = vmul.f32 %v1630, %v1658
        %v1664 = vsel %vm1606, %v1659, 0
        %1666 = vmatprep.subr.mxu0 0.0
        %1667 = vmatpush1.msra.mxu0 %v1088
        %1668 = vmatprep.subr.mxu0 0.0
        %1669 = vmatpush1.msra.mxu0 0.0
        %1670 = vmatprep.subr.mxu0 0.0
        %1671 = vmatpush1.msra.mxu0 0.0
        %1672 = vmatprep.subr.mxu0 0.0
        %1673 = vmatpush1.msra.mxu0 0.0
        %1674 = vmatprep.subr.mxu0 0.0
        %1675 = vmatpush1.msra.mxu0 0.0
        %1676 = vmatprep.subr.mxu0 0.0
        %1677 = vmatpush1.msra.mxu0 0.0
        %1678 = vmatprep.subr.mxu0 0.0
        %1679 = vmatpush1.msra.mxu0 0.0
        %1680 = vmatprep.subr.mxu0 0.0
        %1681 = vmatpush1.msra.mxu0 0.0
        %1682 = vmatprep.subr.mxu0 0.0
        %1683 = vmatpush1.msra.mxu0 0.0
        %1684 = vmatprep.subr.mxu0 0.0
        %1685 = vmatpush1.msra.mxu0 0.0
        %1686 = vmatprep.subr.mxu0 0.0
        %1687 = vmatpush1.msra.mxu0 0.0
        %1688 = vmatprep.subr.mxu0 0.0
        %1689 = vmatpush1.msra.mxu0 0.0
        %1690 = vmatprep.subr.mxu0 0.0
        %1691 = vmatpush1.msra.mxu0 0.0
        %1692 = vmatprep.subr.mxu0 0.0
        %1693 = vmatpush1.msra.mxu0 0.0
        %1694 = vmatprep.subr.mxu0 0.0
        %1695 = vmatpush1.msra.mxu0 0.0
        %1696 = vmatprep.subr.mxu0 0.0
        %1697 = vmatpush1.msra.mxu0 0.0
        %1698 = vmatprep.subr.mxu0 0.0
        %1699 = vmatpush1.msra.mxu0 0.0
        %1700 = vmatprep.subr.mxu0 0.0
        %1701 = vmatpush1.msra.mxu0 0.0
        %1702 = vmatprep.subr.mxu0 0.0
        %1703 = vmatpush1.msra.mxu0 0.0
        %1704 = vmatprep.subr.mxu0 0.0
        %1705 = vmatpush1.msra.mxu0 0.0
        %1706 = vmatprep.subr.mxu0 0.0
        %1707 = vmatpush1.msra.mxu0 0.0
        %1708 = vmatprep.subr.mxu0 0.0
        %1709 = vmatpush1.msra.mxu0 0.0
        %1710 = vmatprep.subr.mxu0 0.0
        %1711 = vmatpush1.msra.mxu0 0.0
        %1712 = vmatprep.subr.mxu0 0.0
        %1713 = vmatpush1.msra.mxu0 0.0
        %1714 = vmatprep.subr.mxu0 0.0
        %1715 = vmatpush1.msra.mxu0 0.0
        %1716 = vmatprep.subr.mxu0 0.0
        %1717 = vmatpush1.msra.mxu0 0.0
        %1718 = vmatprep.subr.mxu0 0.0
        %1719 = vmatpush1.msra.mxu0 0.0
        %1720 = vmatprep.subr.mxu0 0.0
        %1721 = vmatpush1.msra.mxu0 0.0
        %1722 = vmatprep.subr.mxu0 0.0
        %1723 = vmatpush1.msra.mxu0 0.0
        %1724 = vmatprep.subr.mxu0 0.0
        %1725 = vmatpush1.msra.mxu0 0.0
        %1726 = vmatprep.subr.mxu0 0.0
        %1727 = vmatpush1.msra.mxu0 0.0
        %1728 = vmatprep.subr.mxu0 0.0
        %1729 = vmatpush1.msra.mxu0 0.0
        %1730 = vmatprep.mubr.f32.mxu0 0.0
        %1731 = vmatmul.mubr.f32.gmra.mrb[0].mxu0 %v1664
        %v1732 = vpop.f32.mrb[0].mxu0
        %v1733 = vadd.f32 0.0, %v1732
        %v1734 = vpop.f32.mrb[0].mxu0
        %1735 = vdwg.mxu0
        %v1737 = vsel %vm1606, %v1660, 0
        %1739 = vmatprep.subr.mxu0 0.0
        %1740 = vmatpush1.msra.mxu0 %v1158
        %1741 = vmatprep.subr.mxu0 0.0
        %1742 = vmatpush1.msra.mxu0 0.0
        %1743 = vmatprep.subr.mxu0 0.0
        %1744 = vmatpush1.msra.mxu0 0.0
        %1745 = vmatprep.subr.mxu0 0.0
        %1746 = vmatpush1.msra.mxu0 0.0
        %1747 = vmatprep.subr.mxu0 0.0
        %1748 = vmatpush1.msra.mxu0 0.0
        %1749 = vmatprep.subr.mxu0 0.0
        %1750 = vmatpush1.msra.mxu0 0.0
        %1751 = vmatprep.subr.mxu0 0.0
        %1752 = vmatpush1.msra.mxu0 0.0
        %1753 = vmatprep.subr.mxu0 0.0
        %1754 = vmatpush1.msra.mxu0 0.0
        %1755 = vmatprep.subr.mxu0 0.0
        %1756 = vmatpush1.msra.mxu0 0.0
        %1757 = vmatprep.subr.mxu0 0.0
        %1758 = vmatpush1.msra.mxu0 0.0
        %1759 = vmatprep.subr.mxu0 0.0
        %1760 = vmatpush1.msra.mxu0 0.0
        %1761 = vmatprep.subr.mxu0 0.0
        %1762 = vmatpush1.msra.mxu0 0.0
        %1763 = vmatprep.subr.mxu0 0.0
        %1764 = vmatpush1.msra.mxu0 0.0
        %1765 = vmatprep.subr.mxu0 0.0
        %1766 = vmatpush1.msra.mxu0 0.0
        %1767 = vmatprep.subr.mxu0 0.0
        %1768 = vmatpush1.msra.mxu0 0.0
        %1769 = vmatprep.subr.mxu0 0.0
        %1770 = vmatpush1.msra.mxu0 0.0
        %1771 = vmatprep.subr.mxu0 0.0
        %1772 = vmatpush1.msra.mxu0 0.0
        %1773 = vmatprep.subr.mxu0 0.0
        %1774 = vmatpush1.msra.mxu0 0.0
        %1775 = vmatprep.subr.mxu0 0.0
        %1776 = vmatpush1.msra.mxu0 0.0
        %1777 = vmatprep.subr.mxu0 0.0
        %1778 = vmatpush1.msra.mxu0 0.0
        %1779 = vmatprep.subr.mxu0 0.0
        %1780 = vmatpush1.msra.mxu0 0.0
        %1781 = vmatprep.subr.mxu0 0.0
        %1782 = vmatpush1.msra.mxu0 0.0
        %1783 = vmatprep.subr.mxu0 0.0
        %1784 = vmatpush1.msra.mxu0 0.0
        %1785 = vmatprep.subr.mxu0 0.0
        %1786 = vmatpush1.msra.mxu0 0.0
        %1787 = vmatprep.subr.mxu0 0.0
        %1788 = vmatpush1.msra.mxu0 0.0
        %1789 = vmatprep.subr.mxu0 0.0
        %1790 = vmatpush1.msra.mxu0 0.0
        %1791 = vmatprep.subr.mxu0 0.0
        %1792 = vmatpush1.msra.mxu0 0.0
        %1793 = vmatprep.subr.mxu0 0.0
        %1794 = vmatpush1.msra.mxu0 0.0
        %1795 = vmatprep.subr.mxu0 0.0
        %1796 = vmatpush1.msra.mxu0 0.0
        %1797 = vmatprep.subr.mxu0 0.0
        %1798 = vmatpush1.msra.mxu0 0.0
        %1799 = vmatprep.subr.mxu0 0.0
        %1800 = vmatpush1.msra.mxu0 0.0
        %1801 = vmatprep.subr.mxu0 0.0
        %1802 = vmatpush1.msra.mxu0 0.0
        %1803 = vmatprep.mubr.f32.mxu0 0.0
        %1804 = vmatmul.mubr.f32.gmra.mrb[0].mxu0 %v1737
        %v1805 = vpop.f32.mrb[0].mxu0
        %v1806 = vadd.f32 0.0, %v1805
        %v1807 = vpop.f32.mrb[0].mxu0
        %1808 = vdwg.mxu0
        %v1810 = vsel %vm1606, %v1661, 0
        %1812 = vmatprep.subr.mxu0 0.0
        %1813 = vmatpush1.msra.mxu0 %v1228
        %1814 = vmatprep.subr.mxu0 0.0
        %1815 = vmatpush1.msra.mxu0 0.0
        %1816 = vmatprep.subr.mxu0 0.0
        %1817 = vmatpush1.msra.mxu0 0.0
        %1818 = vmatprep.subr.mxu0 0.0
        %1819 = vmatpush1.msra.mxu0 0.0
        %1820 = vmatprep.subr.mxu0 0.0
        %1821 = vmatpush1.msra.mxu0 0.0
        %1822 = vmatprep.subr.mxu0 0.0
        %1823 = vmatpush1.msra.mxu0 0.0
        %1824 = vmatprep.subr.mxu0 0.0
        %1825 = vmatpush1.msra.mxu0 0.0
        %1826 = vmatprep.subr.mxu0 0.0
        %1827 = vmatpush1.msra.mxu0 0.0
        %1828 = vmatprep.subr.mxu0 0.0
        %1829 = vmatpush1.msra.mxu0 0.0
        %1830 = vmatprep.subr.mxu0 0.0
        %1831 = vmatpush1.msra.mxu0 0.0
        %1832 = vmatprep.subr.mxu0 0.0
        %1833 = vmatpush1.msra.mxu0 0.0
        %1834 = vmatprep.subr.mxu0 0.0
        %1835 = vmatpush1.msra.mxu0 0.0
        %1836 = vmatprep.subr.mxu0 0.0
        %1837 = vmatpush1.msra.mxu0 0.0
        %1838 = vmatprep.subr.mxu0 0.0
        %1839 = vmatpush1.msra.mxu0 0.0
        %1840 = vmatprep.subr.mxu0 0.0
        %1841 = vmatpush1.msra.mxu0 0.0
        %1842 = vmatprep.subr.mxu0 0.0
        %1843 = vmatpush1.msra.mxu0 0.0
        %1844 = vmatprep.subr.mxu0 0.0
        %1845 = vmatpush1.msra.mxu0 0.0
        %1846 = vmatprep.subr.mxu0 0.0
        %1847 = vmatpush1.msra.mxu0 0.0
        %1848 = vmatprep.subr.mxu0 0.0
        %1849 = vmatpush1.msra.mxu0 0.0
        %1850 = vmatprep.subr.mxu0 0.0
        %1851 = vmatpush1.msra.mxu0 0.0
        %1852 = vmatprep.subr.mxu0 0.0
        %1853 = vmatpush1.msra.mxu0 0.0
        %1854 = vmatprep.subr.mxu0 0.0
        %1855 = vmatpush1.msra.mxu0 0.0
        %1856 = vmatprep.subr.mxu0 0.0
        %1857 = vmatpush1.msra.mxu0 0.0
        %1858 = vmatprep.subr.mxu0 0.0
        %1859 = vmatpush1.msra.mxu0 0.0
        %1860 = vmatprep.subr.mxu0 0.0
        %1861 = vmatpush1.msra.mxu0 0.0
        %1862 = vmatprep.subr.mxu0 0.0
        %1863 = vmatpush1.msra.mxu0 0.0
        %1864 = vmatprep.subr.mxu0 0.0
        %1865 = vmatpush1.msra.mxu0 0.0
        %1866 = vmatprep.subr.mxu0 0.0
        %1867 = vmatpush1.msra.mxu0 0.0
        %1868 = vmatprep.subr.mxu0 0.0
        %1869 = vmatpush1.msra.mxu0 0.0
        %1870 = vmatprep.subr.mxu0 0.0
        %1871 = vmatpush1.msra.mxu0 0.0
        %1872 = vmatprep.subr.mxu0 0.0
        %1873 = vmatpush1.msra.mxu0 0.0
        %1874 = vmatprep.subr.mxu0 0.0
        %1875 = vmatpush1.msra.mxu0 0.0
        %1876 = vmatprep.mubr.f32.mxu0 0.0
        %1877 = vmatmul.mubr.f32.gmra.mrb[0].mxu0 %v1810
        %v1878 = vpop.f32.mrb[0].mxu0
        %v1879 = vadd.f32 0.0, %v1878
        %v1880 = vpop.f32.mrb[0].mxu0
        %1881 = vdwg.mxu0
        %v1883 = vsel %vm1606, %v1662, 0
        %1885 = vmatprep.subr.mxu0 0.0
        %1886 = vmatpush1.msra.mxu0 %v1298
        %1887 = vmatprep.subr.mxu0 0.0
        %1888 = vmatpush1.msra.mxu0 0.0
        %1889 = vmatprep.subr.mxu0 0.0
        %1890 = vmatpush1.msra.mxu0 0.0
        %1891 = vmatprep.subr.mxu0 0.0
        %1892 = vmatpush1.msra.mxu0 0.0
        %1893 = vmatprep.subr.mxu0 0.0
        %1894 = vmatpush1.msra.mxu0 0.0
        %1895 = vmatprep.subr.mxu0 0.0
        %1896 = vmatpush1.msra.mxu0 0.0
        %1897 = vmatprep.subr.mxu0 0.0
        %1898 = vmatpush1.msra.mxu0 0.0
        %1899 = vmatprep.subr.mxu0 0.0
        %1900 = vmatpush1.msra.mxu0 0.0
        %1901 = vmatprep.subr.mxu0 0.0
        %1902 = vmatpush1.msra.mxu0 0.0
        %1903 = vmatprep.subr.mxu0 0.0
        %1904 = vmatpush1.msra.mxu0 0.0
        %1905 = vmatprep.subr.mxu0 0.0
        %1906 = vmatpush1.msra.mxu0 0.0
        %1907 = vmatprep.subr.mxu0 0.0
        %1908 = vmatpush1.msra.mxu0 0.0
        %1909 = vmatprep.subr.mxu0 0.0
        %1910 = vmatpush1.msra.mxu0 0.0
        %1911 = vmatprep.subr.mxu0 0.0
        %1912 = vmatpush1.msra.mxu0 0.0
        %1913 = vmatprep.subr.mxu0 0.0
        %1914 = vmatpush1.msra.mxu0 0.0
        %1915 = vmatprep.subr.mxu0 0.0
        %1916 = vmatpush1.msra.mxu0 0.0
        %1917 = vmatprep.subr.mxu0 0.0
        %1918 = vmatpush1.msra.mxu0 0.0
        %1919 = vmatprep.subr.mxu0 0.0
        %1920 = vmatpush1.msra.mxu0 0.0
        %1921 = vmatprep.subr.mxu0 0.0
        %1922 = vmatpush1.msra.mxu0 0.0
        %1923 = vmatprep.subr.mxu0 0.0
        %1924 = vmatpush1.msra.mxu0 0.0
        %1925 = vmatprep.subr.mxu0 0.0
        %1926 = vmatpush1.msra.mxu0 0.0
        %1927 = vmatprep.subr.mxu0 0.0
        %1928 = vmatpush1.msra.mxu0 0.0
        %1929 = vmatprep.subr.mxu0 0.0
        %1930 = vmatpush1.msra.mxu0 0.0
        %1931 = vmatprep.subr.mxu0 0.0
        %1932 = vmatpush1.msra.mxu0 0.0
        %1933 = vmatprep.subr.mxu0 0.0
        %1934 = vmatpush1.msra.mxu0 0.0
        %1935 = vmatprep.subr.mxu0 0.0
        %1936 = vmatpush1.msra.mxu0 0.0
        %1937 = vmatprep.subr.mxu0 0.0
        %1938 = vmatpush1.msra.mxu0 0.0
        %1939 = vmatprep.subr.mxu0 0.0
        %1940 = vmatpush1.msra.mxu0 0.0
        %1941 = vmatprep.subr.mxu0 0.0
        %1942 = vmatpush1.msra.mxu0 0.0
        %1943 = vmatprep.subr.mxu0 0.0
        %1944 = vmatpush1.msra.mxu0 0.0
        %1945 = vmatprep.subr.mxu0 0.0
        %1946 = vmatpush1.msra.mxu0 0.0
        %1947 = vmatprep.subr.mxu0 0.0
        %1948 = vmatpush1.msra.mxu0 0.0
        %1949 = vmatprep.mubr.f32.mxu0 0.0
        %1950 = vmatmul.mubr.f32.gmra.mrb[0].mxu0 %v1883
        %v1951 = vpop.f32.mrb[0].mxu0
        %v1952 = vadd.f32 0.0, %v1951
        %v1953 = vpop.f32.mrb[0].mxu0
        %1954 = vdwg.mxu0
        %v1955 = vld [vmem:[%s379] sm:$0xff]
        %v1956 = vld [vmem:[%s379 + $0x8] sm:$0xff]
        %v1957 = vld [vmem:[%s379 + $0x10] sm:$0xff]
        %v1958 = vld [vmem:[%s379 + $0x18] sm:$0xff]
        %v1959 = vld [vmem:[%s379 + $0x20] sm:$0xff]
        %v1960 = vld [vmem:[%s379 + $0x28] sm:$0xff]
        %v1961 = vld [vmem:[%s379 + $0x30] sm:$0xff]
        %v1962 = vld [vmem:[%s379 + $0x38] sm:$0xff]
        %v1964 = vsel %vm1301, %v1733, 0
        %1966 = vmatprep.subr.mxu0 0.0
        %1967 = vmatpush1.msra.mxu0 %v1955
        %1968 = vmatprep.subr.mxu0 0.0
        %1969 = vmatpush1.msra.mxu0 %v1956
        %1970 = vmatprep.subr.mxu0 0.0
        %1971 = vmatpush1.msra.mxu0 0.0
        %1972 = vmatprep.subr.mxu0 0.0
        %1973 = vmatpush1.msra.mxu0 0.0
        %1974 = vmatprep.subr.mxu0 0.0
        %1975 = vmatpush1.msra.mxu0 0.0
        %1976 = vmatprep.subr.mxu0 0.0
        %1977 = vmatpush1.msra.mxu0 0.0
        %1978 = vmatprep.subr.mxu0 0.0
        %1979 = vmatpush1.msra.mxu0 0.0
        %1980 = vmatprep.subr.mxu0 0.0
        %1981 = vmatpush1.msra.mxu0 0.0
        %1982 = vmatprep.subr.mxu0 0.0
        %1983 = vmatpush1.msra.mxu0 0.0
        %1984 = vmatprep.subr.mxu0 0.0
        %1985 = vmatpush1.msra.mxu0 0.0
        %1986 = vmatprep.subr.mxu0 0.0
        %1987 = vmatpush1.msra.mxu0 0.0
        %1988 = vmatprep.subr.mxu0 0.0
        %1989 = vmatpush1.msra.mxu0 0.0
        %1990 = vmatprep.subr.mxu0 0.0
        %1991 = vmatpush1.msra.mxu0 0.0
        %1992 = vmatprep.subr.mxu0 0.0
        %1993 = vmatpush1.msra.mxu0 0.0
        %1994 = vmatprep.subr.mxu0 0.0
        %1995 = vmatpush1.msra.mxu0 0.0
        %1996 = vmatprep.subr.mxu0 0.0
        %1997 = vmatpush1.msra.mxu0 0.0
        %1998 = vmatprep.subr.mxu0 0.0
        %1999 = vmatpush1.msra.mxu0 0.0
        %2000 = vmatprep.subr.mxu0 0.0
        %2001 = vmatpush1.msra.mxu0 0.0
        %2002 = vmatprep.subr.mxu0 0.0
        %2003 = vmatpush1.msra.mxu0 0.0
        %2004 = vmatprep.subr.mxu0 0.0
        %2005 = vmatpush1.msra.mxu0 0.0
        %2006 = vmatprep.subr.mxu0 0.0
        %2007 = vmatpush1.msra.mxu0 0.0
        %2008 = vmatprep.subr.mxu0 0.0
        %2009 = vmatpush1.msra.mxu0 0.0
        %2010 = vmatprep.subr.mxu0 0.0
        %2011 = vmatpush1.msra.mxu0 0.0
        %2012 = vmatprep.subr.mxu0 0.0
        %2013 = vmatpush1.msra.mxu0 0.0
        %2014 = vmatprep.subr.mxu0 0.0
        %2015 = vmatpush1.msra.mxu0 0.0
        %2016 = vmatprep.subr.mxu0 0.0
        %2017 = vmatpush1.msra.mxu0 0.0
        %2018 = vmatprep.subr.mxu0 0.0
        %2019 = vmatpush1.msra.mxu0 0.0
        %2020 = vmatprep.subr.mxu0 0.0
        %2021 = vmatpush1.msra.mxu0 0.0
        %2022 = vmatprep.subr.mxu0 0.0
        %2023 = vmatpush1.msra.mxu0 0.0
        %2024 = vmatprep.subr.mxu0 0.0
        %2025 = vmatpush1.msra.mxu0 0.0
        %2026 = vmatprep.subr.mxu0 0.0
        %2027 = vmatpush1.msra.mxu0 0.0
        %2028 = vmatprep.subr.mxu0 0.0
        %2029 = vmatpush1.msra.mxu0 0.0
        %2030 = vmatprep.mubr.f32.mxu0 0.0
        %2031 = vmatmul.mubr.f32.gmra.mrb[0].mxu0 %v1964
        %v2032 = vpop.f32.mrb[0].mxu0
        %v2033 = vadd.f32 0.0, %v2032
        %v2034 = vpop.f32.mrb[0].mxu0
        %2035 = vdwg.mxu0
        %v2037 = vsel %vm1301, %v1806, 0
        %2039 = vmatprep.subr.mxu0 0.0
        %2040 = vmatpush1.msra.mxu0 %v1957
        %2041 = vmatprep.subr.mxu0 0.0
        %2042 = vmatpush1.msra.mxu0 %v1958
        %2043 = vmatprep.subr.mxu0 0.0
        %2044 = vmatpush1.msra.mxu0 0.0
        %2045 = vmatprep.subr.mxu0 0.0
        %2046 = vmatpush1.msra.mxu0 0.0
        %2047 = vmatprep.subr.mxu0 0.0
        %2048 = vmatpush1.msra.mxu0 0.0
        %2049 = vmatprep.subr.mxu0 0.0
        %2050 = vmatpush1.msra.mxu0 0.0
        %2051 = vmatprep.subr.mxu0 0.0
        %2052 = vmatpush1.msra.mxu0 0.0
        %2053 = vmatprep.subr.mxu0 0.0
        %2054 = vmatpush1.msra.mxu0 0.0
        %2055 = vmatprep.subr.mxu0 0.0
        %2056 = vmatpush1.msra.mxu0 0.0
        %2057 = vmatprep.subr.mxu0 0.0
        %2058 = vmatpush1.msra.mxu0 0.0
        %2059 = vmatprep.subr.mxu0 0.0
        %2060 = vmatpush1.msra.mxu0 0.0
        %2061 = vmatprep.subr.mxu0 0.0
        %2062 = vmatpush1.msra.mxu0 0.0
        %2063 = vmatprep.subr.mxu0 0.0
        %2064 = vmatpush1.msra.mxu0 0.0
        %2065 = vmatprep.subr.mxu0 0.0
        %2066 = vmatpush1.msra.mxu0 0.0
        %2067 = vmatprep.subr.mxu0 0.0
        %2068 = vmatpush1.msra.mxu0 0.0
        %2069 = vmatprep.subr.mxu0 0.0
        %2070 = vmatpush1.msra.mxu0 0.0
        %2071 = vmatprep.subr.mxu0 0.0
        %2072 = vmatpush1.msra.mxu0 0.0
        %2073 = vmatprep.subr.mxu0 0.0
        %2074 = vmatpush1.msra.mxu0 0.0
        %2075 = vmatprep.subr.mxu0 0.0
        %2076 = vmatpush1.msra.mxu0 0.0
        %2077 = vmatprep.subr.mxu0 0.0
        %2078 = vmatpush1.msra.mxu0 0.0
        %2079 = vmatprep.subr.mxu0 0.0
        %2080 = vmatpush1.msra.mxu0 0.0
        %2081 = vmatprep.subr.mxu0 0.0
        %2082 = vmatpush1.msra.mxu0 0.0
        %2083 = vmatprep.subr.mxu0 0.0
        %2084 = vmatpush1.msra.mxu0 0.0
        %2085 = vmatprep.subr.mxu0 0.0
        %2086 = vmatpush1.msra.mxu0 0.0
        %2087 = vmatprep.subr.mxu0 0.0
        %2088 = vmatpush1.msra.mxu0 0.0
        %2089 = vmatprep.subr.mxu0 0.0
        %2090 = vmatpush1.msra.mxu0 0.0
        %2091 = vmatprep.subr.mxu0 0.0
        %2092 = vmatpush1.msra.mxu0 0.0
        %2093 = vmatprep.subr.mxu0 0.0
        %2094 = vmatpush1.msra.mxu0 0.0
        %2095 = vmatprep.subr.mxu0 0.0
        %2096 = vmatpush1.msra.mxu0 0.0
        %2097 = vmatprep.subr.mxu0 0.0
        %2098 = vmatpush1.msra.mxu0 0.0
        %2099 = vmatprep.subr.mxu0 0.0
        %2100 = vmatpush1.msra.mxu0 0.0
        %2101 = vmatprep.subr.mxu0 0.0
        %2102 = vmatpush1.msra.mxu0 0.0
        %2103 = vmatprep.mubr.f32.mxu0 0.0
        %2104 = vmatmul.mubr.f32.gmra.mrb[0].mxu0 %v2037
        %v2105 = vpop.f32.mrb[0].mxu0
        %v2106 = vadd.f32 0.0, %v2105
        %v2107 = vpop.f32.mrb[0].mxu0
        %2108 = vdwg.mxu0
        %v2110 = vsel %vm1301, %v1879, 0
        %2112 = vmatprep.subr.mxu0 0.0
        %2113 = vmatpush1.msra.mxu0 %v1959
        %2114 = vmatprep.subr.mxu0 0.0
        %2115 = vmatpush1.msra.mxu0 %v1960
        %2116 = vmatprep.subr.mxu0 0.0
        %2117 = vmatpush1.msra.mxu0 0.0
        %2118 = vmatprep.subr.mxu0 0.0
        %2119 = vmatpush1.msra.mxu0 0.0
        %2120 = vmatprep.subr.mxu0 0.0
        %2121 = vmatpush1.msra.mxu0 0.0
        %2122 = vmatprep.subr.mxu0 0.0
        %2123 = vmatpush1.msra.mxu0 0.0
        %2124 = vmatprep.subr.mxu0 0.0
        %2125 = vmatpush1.msra.mxu0 0.0
        %2126 = vmatprep.subr.mxu0 0.0
        %2127 = vmatpush1.msra.mxu0 0.0
        %2128 = vmatprep.subr.mxu0 0.0
        %2129 = vmatpush1.msra.mxu0 0.0
        %2130 = vmatprep.subr.mxu0 0.0
        %2131 = vmatpush1.msra.mxu0 0.0
        %2132 = vmatprep.subr.mxu0 0.0
        %2133 = vmatpush1.msra.mxu0 0.0
        %2134 = vmatprep.subr.mxu0 0.0
        %2135 = vmatpush1.msra.mxu0 0.0
        %2136 = vmatprep.subr.mxu0 0.0
        %2137 = vmatpush1.msra.mxu0 0.0
        %2138 = vmatprep.subr.mxu0 0.0
        %2139 = vmatpush1.msra.mxu0 0.0
        %2140 = vmatprep.subr.mxu0 0.0
        %2141 = vmatpush1.msra.mxu0 0.0
        %2142 = vmatprep.subr.mxu0 0.0
        %2143 = vmatpush1.msra.mxu0 0.0
        %2144 = vmatprep.subr.mxu0 0.0
        %2145 = vmatpush1.msra.mxu0 0.0
        %2146 = vmatprep.subr.mxu0 0.0
        %2147 = vmatpush1.msra.mxu0 0.0
        %2148 = vmatprep.subr.mxu0 0.0
        %2149 = vmatpush1.msra.mxu0 0.0
        %2150 = vmatprep.subr.mxu0 0.0
        %2151 = vmatpush1.msra.mxu0 0.0
        %2152 = vmatprep.subr.mxu0 0.0
        %2153 = vmatpush1.msra.mxu0 0.0
        %2154 = vmatprep.subr.mxu0 0.0
        %2155 = vmatpush1.msra.mxu0 0.0
        %2156 = vmatprep.subr.mxu0 0.0
        %2157 = vmatpush1.msra.mxu0 0.0
        %2158 = vmatprep.subr.mxu0 0.0
        %2159 = vmatpush1.msra.mxu0 0.0
        %2160 = vmatprep.subr.mxu0 0.0
        %2161 = vmatpush1.msra.mxu0 0.0
        %2162 = vmatprep.subr.mxu0 0.0
        %2163 = vmatpush1.msra.mxu0 0.0
        %2164 = vmatprep.subr.mxu0 0.0
        %2165 = vmatpush1.msra.mxu0 0.0
        %2166 = vmatprep.subr.mxu0 0.0
        %2167 = vmatpush1.msra.mxu0 0.0
        %2168 = vmatprep.subr.mxu0 0.0
        %2169 = vmatpush1.msra.mxu0 0.0
        %2170 = vmatprep.subr.mxu0 0.0
        %2171 = vmatpush1.msra.mxu0 0.0
        %2172 = vmatprep.subr.mxu0 0.0
        %2173 = vmatpush1.msra.mxu0 0.0
        %2174 = vmatprep.subr.mxu0 0.0
        %2175 = vmatpush1.msra.mxu0 0.0
        %2176 = vmatprep.mubr.f32.mxu0 0.0
        %2177 = vmatmul.mubr.f32.gmra.mrb[0].mxu0 %v2110
        %v2178 = vpop.f32.mrb[0].mxu0
        %v2179 = vadd.f32 0.0, %v2178
        %v2180 = vpop.f32.mrb[0].mxu0
        %2181 = vdwg.mxu0
        %v2183 = vsel %vm1301, %v1952, 0
        %2185 = vmatprep.subr.mxu0 0.0
        %2186 = vmatpush1.msra.mxu0 %v1961
        %2187 = vmatprep.subr.mxu0 0.0
        %2188 = vmatpush1.msra.mxu0 %v1962
        %2189 = vmatprep.subr.mxu0 0.0
        %2190 = vmatpush1.msra.mxu0 0.0
        %2191 = vmatprep.subr.mxu0 0.0
        %2192 = vmatpush1.msra.mxu0 0.0
        %2193 = vmatprep.subr.mxu0 0.0
        %2194 = vmatpush1.msra.mxu0 0.0
        %2195 = vmatprep.subr.mxu0 0.0
        %2196 = vmatpush1.msra.mxu0 0.0
        %2197 = vmatprep.subr.mxu0 0.0
        %2198 = vmatpush1.msra.mxu0 0.0
        %2199 = vmatprep.subr.mxu0 0.0
        %2200 = vmatpush1.msra.mxu0 0.0
        %2201 = vmatprep.subr.mxu0 0.0
        %2202 = vmatpush1.msra.mxu0 0.0
        %2203 = vmatprep.subr.mxu0 0.0
        %2204 = vmatpush1.msra.mxu0 0.0
        %2205 = vmatprep.subr.mxu0 0.0
        %2206 = vmatpush1.msra.mxu0 0.0
        %2207 = vmatprep.subr.mxu0 0.0
        %2208 = vmatpush1.msra.mxu0 0.0
        %2209 = vmatprep.subr.mxu0 0.0
        %2210 = vmatpush1.msra.mxu0 0.0
        %2211 = vmatprep.subr.mxu0 0.0
        %2212 = vmatpush1.msra.mxu0 0.0
        %2213 = vmatprep.subr.mxu0 0.0
        %2214 = vmatpush1.msra.mxu0 0.0
        %2215 = vmatprep.subr.mxu0 0.0
        %2216 = vmatpush1.msra.mxu0 0.0
        %2217 = vmatprep.subr.mxu0 0.0
        %2218 = vmatpush1.msra.mxu0 0.0
        %2219 = vmatprep.subr.mxu0 0.0
        %2220 = vmatpush1.msra.mxu0 0.0
        %2221 = vmatprep.subr.mxu0 0.0
        %2222 = vmatpush1.msra.mxu0 0.0
        %2223 = vmatprep.subr.mxu0 0.0
        %2224 = vmatpush1.msra.mxu0 0.0
        %2225 = vmatprep.subr.mxu0 0.0
        %2226 = vmatpush1.msra.mxu0 0.0
        %2227 = vmatprep.subr.mxu0 0.0
        %2228 = vmatpush1.msra.mxu0 0.0
        %2229 = vmatprep.subr.mxu0 0.0
        %2230 = vmatpush1.msra.mxu0 0.0
        %2231 = vmatprep.subr.mxu0 0.0
        %2232 = vmatpush1.msra.mxu0 0.0
        %2233 = vmatprep.subr.mxu0 0.0
        %2234 = vmatpush1.msra.mxu0 0.0
        %2235 = vmatprep.subr.mxu0 0.0
        %2236 = vmatpush1.msra.mxu0 0.0
        %2237 = vmatprep.subr.mxu0 0.0
        %2238 = vmatpush1.msra.mxu0 0.0
        %2239 = vmatprep.subr.mxu0 0.0
        %2240 = vmatpush1.msra.mxu0 0.0
        %2241 = vmatprep.subr.mxu0 0.0
        %2242 = vmatpush1.msra.mxu0 0.0
        %2243 = vmatprep.subr.mxu0 0.0
        %2244 = vmatpush1.msra.mxu0 0.0
        %2245 = vmatprep.subr.mxu0 0.0
        %2246 = vmatpush1.msra.mxu0 0.0
        %2247 = vmatprep.subr.mxu0 0.0
        %2248 = vmatpush1.msra.mxu0 0.0
        %2249 = vmatprep.mubr.f32.mxu0 0.0
        %2250 = vmatmul.mubr.f32.gmra.mrb[0].mxu0 %v2183
        %v2251 = vpop.f32.mrb[0].mxu0
        %v2252 = vadd.f32 0.0, %v2251
        %v2253 = vpop.f32.mrb[0].mxu0
        %2254 = vdwg.mxu0
        %v2255 = vsel %vm457, %v2033, 0.0
        %v2256 = vsel %vm457, %v2106, 0.0
        %v2257 = vadd.f32 %v2255, %v2256
        %v2258 = vsel %vm457, %v2179, 0.0
        %v2259 = vadd.f32 %v2257, %v2258
        %v2260 = vsel %vm457, %v2252, 0.0
        %v2261 = vadd.f32 %v2259, %v2260
        %v2262 = vlaneseq
        %v2263 = vshrl.u32 %v2262, 7
        %v2264 = vsub.s32 0, %v2263
        %v2265 = vrot.slane %v405, %v2264
        %v2266 = vadd.f32 %v2261, %v2265
        %v2267 = vadd.f32 %v404, %v2266
        %v2268 = vsel %vm457, %v2267, 0.0
        %2269 = vadd.xlane.f32.xlu0 %v2268
        %v2270 = vpop.xlane.xlu0 %2269
        %v2271 = vrcp.pop 32.0
        %v2272 = vmul.f32 %v2270, %v2271
        %v2273 = vsub.f32 %v2267, %v2272
        %v2274 = vmul.f32 %v2273, %v2273
        %v2275 = vsel %vm457, %v2274, 0.0
        %2276 = vadd.xlane.f32.xlu0 %v2275
        %v2277 = vpop.xlane.xlu0 %2276
        %v2278 = vmul.f32 %v2277, %v2271
        %v2279 = vadd.f32 %v2278, 1e-05
        %v2280 = vrsqrt.pop %v2279
        %v2281 = vmul.f32 %v2273, %v2280
        %v2282 = vlaneseq
        %v2283 = vshrl.u32 %v2282, 7
        %v2284 = vsub.s32 1, %v2283
        %v2285 = vrot.slane %v405, %v2284
        %v2286 = vmul.f32 %v2281, %v2285
        %v2287 = vlaneseq
        %v2288 = vshrl.u32 %v2287, 7
        %v2289 = vsub.s32 2, %v2288
        %v2290 = vrot.slane %v405, %v2289
        %v2291 = vadd.f32 %v2286, %v2290
        %v2292 = vld [vmem:[%s384] sm:$0xff]
        %v2293 = vld [vmem:[%s384 + $0x8] sm:$0xff]
        %v2294 = vld [vmem:[%s384 + $0x10] sm:$0xff]
        %v2295 = vld [vmem:[%s384 + $0x18] sm:$0xff]
        %v2297 = vlaneseq
        %v2298 = vshrl.u32 %v2297, 7
        %v2299 = vsub.s32 0, %v2298
        %v2300 = vrot.slane %v406, %v2299
        %v2303 = vsel %vm457, %v2291, 0
        %2305 = vmatprep.subr.mxu0 0.0
        %2306 = vmatpush1.msra.mxu0 %v2292
        %2307 = vmatprep.subr.mxu0 0.0
        %2308 = vmatpush1.msra.mxu0 %v2293
        %2309 = vmatprep.subr.mxu0 0.0
        %2310 = vmatpush1.msra.mxu0 %v2294
        %2311 = vmatprep.subr.mxu0 0.0
        %2312 = vmatpush1.msra.mxu0 %v2295
        %2313 = vmatprep.subr.mxu0 0.0
        %2314 = vmatpush1.msra.mxu0 0.0
        %2315 = vmatprep.subr.mxu0 0.0
        %2316 = vmatpush1.msra.mxu0 0.0
        %2317 = vmatprep.subr.mxu0 0.0
        %2318 = vmatpush1.msra.mxu0 0.0
        %2319 = vmatprep.subr.mxu0 0.0
        %2320 = vmatpush1.msra.mxu0 0.0
        %2321 = vmatprep.subr.mxu0 0.0
        %2322 = vmatpush1.msra.mxu0 0.0
        %2323 = vmatprep.subr.mxu0 0.0
        %2324 = vmatpush1.msra.mxu0 0.0
        %2325 = vmatprep.subr.mxu0 0.0
        %2326 = vmatpush1.msra.mxu0 0.0
        %2327 = vmatprep.subr.mxu0 0.0
        %2328 = vmatpush1.msra.mxu0 0.0
        %2329 = vmatprep.subr.mxu0 0.0
        %2330 = vmatpush1.msra.mxu0 0.0
        %2331 = vmatprep.subr.mxu0 0.0
        %2332 = vmatpush1.msra.mxu0 0.0
        %2333 = vmatprep.subr.mxu0 0.0
        %2334 = vmatpush1.msra.mxu0 0.0
        %2335 = vmatprep.subr.mxu0 0.0
        %2336 = vmatpush1.msra.mxu0 0.0
        %2337 = vmatprep.subr.mxu0 0.0
        %2338 = vmatpush1.msra.mxu0 0.0
        %2339 = vmatprep.subr.mxu0 0.0
        %2340 = vmatpush1.msra.mxu0 0.0
        %2341 = vmatprep.subr.mxu0 0.0
        %2342 = vmatpush1.msra.mxu0 0.0
        %2343 = vmatprep.subr.mxu0 0.0
        %2344 = vmatpush1.msra.mxu0 0.0
        %2345 = vmatprep.subr.mxu0 0.0
        %2346 = vmatpush1.msra.mxu0 0.0
        %2347 = vmatprep.subr.mxu0 0.0
        %2348 = vmatpush1.msra.mxu0 0.0
        %2349 = vmatprep.subr.mxu0 0.0
        %2350 = vmatpush1.msra.mxu0 0.0
        %2351 = vmatprep.subr.mxu0 0.0
        %2352 = vmatpush1.msra.mxu0 0.0
        %2353 = vmatprep.subr.mxu0 0.0
        %2354 = vmatpush1.msra.mxu0 0.0
        %2355 = vmatprep.subr.mxu0 0.0
        %2356 = vmatpush1.msra.mxu0 0.0
        %2357 = vmatprep.subr.mxu0 0.0
        %2358 = vmatpush1.msra.mxu0 0.0
        %2359 = vmatprep.subr.mxu0 0.0
        %2360 = vmatpush1.msra.mxu0 0.0
        %2361 = vmatprep.subr.mxu0 0.0
        %2362 = vmatpush1.msra.mxu0 0.0
        %2363 = vmatprep.subr.mxu0 0.0
        %2364 = vmatpush1.msra.mxu0 0.0
        %2365 = vmatprep.subr.mxu0 0.0
        %2366 = vmatpush1.msra.mxu0 0.0
        %2367 = vmatprep.subr.mxu0 0.0
        %2368 = vmatpush1.msra.mxu0 0.0
        %2369 = vmatprep.mubr.f32.mxu0 0.0
        %2370 = vmatmul.mubr.f32.gmra.mrb[0].mxu0 %v2303
        %v2371 = vpop.f32.mrb[0].mxu0
        %v2372 = vadd.f32 %v2300, %v2371
        %v2373 = vpop.f32.mrb[0].mxu0
        %2374 = vdwg.mxu0
        %v2375 = vmax.f32 %v2372, 0.0
        %v2376 = vld [vmem:[%s389] sm:$0xff]
        %v2377 = vld [vmem:[%s389 + $0x8] sm:$0xff]
        %v2378 = vld [vmem:[%s389 + $0x10] sm:$0xff]
        %v2379 = vld [vmem:[%s389 + $0x18] sm:$0xff]
        %v2380 = vld [vmem:[%s389 + $0x20] sm:$0xff]
        %v2381 = vld [vmem:[%s389 + $0x28] sm:$0xff]
        %v2382 = vld [vmem:[%s389 + $0x30] sm:$0xff]
        %v2383 = vld [vmem:[%s389 + $0x38] sm:$0xff]
        %v2384 = vld [vmem:[%s389 + $0x40] sm:$0xff]
        %v2385 = vld [vmem:[%s389 + $0x48] sm:$0xff]
        %v2386 = vld [vmem:[%s389 + $0x50] sm:$0xff]
        %v2387 = vld [vmem:[%s389 + $0x58] sm:$0xff]
        %v2388 = vld [vmem:[%s389 + $0x60] sm:$0xff]
        %v2389 = vld [vmem:[%s389 + $0x68] sm:$0xff]
        %v2390 = vld [vmem:[%s389 + $0x70] sm:$0xff]
        %v2391 = vld [vmem:[%s389 + $0x78] sm:$0xff]
        %v2392 = vlaneseq
        %v2393 = vshrl.u32 %v2392, 7
        %v2394 = vsub.s32 3, %v2393
        %v2395 = vrot.slane %v405, %v2394
        %2396 = vmatprep.subr.mxu0 0.0
        %2397 = vmatpush1.msra.mxu0 %v2376
        %2398 = vmatprep.subr.mxu0 0.0
        %2399 = vmatpush1.msra.mxu0 %v2377
        %2400 = vmatprep.subr.mxu0 0.0
        %2401 = vmatpush1.msra.mxu0 %v2378
        %2402 = vmatprep.subr.mxu0 0.0
        %2403 = vmatpush1.msra.mxu0 %v2379
        %2404 = vmatprep.subr.mxu0 0.0
        %2405 = vmatpush1.msra.mxu0 %v2380
        %2406 = vmatprep.subr.mxu0 0.0
        %2407 = vmatpush1.msra.mxu0 %v2381
        %2408 = vmatprep.subr.mxu0 0.0
        %2409 = vmatpush1.msra.mxu0 %v2382
        %2410 = vmatprep.subr.mxu0 0.0
        %2411 = vmatpush1.msra.mxu0 %v2383
        %2412 = vmatprep.subr.mxu0 0.0
        %2413 = vmatpush1.msra.mxu0 %v2384
        %2414 = vmatprep.subr.mxu0 0.0
        %2415 = vmatpush1.msra.mxu0 %v2385
        %2416 = vmatprep.subr.mxu0 0.0
        %2417 = vmatpush1.msra.mxu0 %v2386
        %2418 = vmatprep.subr.mxu0 0.0
        %2419 = vmatpush1.msra.mxu0 %v2387
        %2420 = vmatprep.subr.mxu0 0.0
        %2421 = vmatpush1.msra.mxu0 %v2388
        %2422 = vmatprep.subr.mxu0 0.0
        %2423 = vmatpush1.msra.mxu0 %v2389
        %2424 = vmatprep.subr.mxu0 0.0
        %2425 = vmatpush1.msra.mxu0 %v2390
        %2426 = vmatprep.subr.mxu0 0.0
        %2427 = vmatpush1.msra.mxu0 %v2391
        %2428 = vmatprep.subr.mxu0 0.0
        %2429 = vmatpush1.msra.mxu0 0.0
        %2430 = vmatprep.subr.mxu0 0.0
        %2431 = vmatpush1.msra.mxu0 0.0
        %2432 = vmatprep.subr.mxu0 0.0
        %2433 = vmatpush1.msra.mxu0 0.0
        %2434 = vmatprep.subr.mxu0 0.0
        %2435 = vmatpush1.msra.mxu0 0.0
        %2436 = vmatprep.subr.mxu0 0.0
        %2437 = vmatpush1.msra.mxu0 0.0
        %2438 = vmatprep.subr.mxu0 0.0
        %2439 = vmatpush1.msra.mxu0 0.0
        %2440 = vmatprep.subr.mxu0 0.0
        %2441 = vmatpush1.msra.mxu0 0.0
        %2442 = vmatprep.subr.mxu0 0.0
        %2443 = vmatpush1.msra.mxu0 0.0
        %2444 = vmatprep.subr.mxu0 0.0
        %2445 = vmatpush1.msra.mxu0 0.0
        %2446 = vmatprep.subr.mxu0 0.0
        %2447 = vmatpush1.msra.mxu0 0.0
        %2448 = vmatprep.subr.mxu0 0.0
        %2449 = vmatpush1.msra.mxu0 0.0
        %2450 = vmatprep.subr.mxu0 0.0
        %2451 = vmatpush1.msra.mxu0 0.0
        %2452 = vmatprep.subr.mxu0 0.0
        %2453 = vmatpush1.msra.mxu0 0.0
        %2454 = vmatprep.subr.mxu0 0.0
        %2455 = vmatpush1.msra.mxu0 0.0
        %2456 = vmatprep.subr.mxu0 0.0
        %2457 = vmatpush1.msra.mxu0 0.0
        %2458 = vmatprep.subr.mxu0 0.0
        %2459 = vmatpush1.msra.mxu0 0.0
        %2460 = vmatprep.mubr.f32.mxu0 0.0
        %2461 = vmatmul.mubr.f32.gmra.mrb[0].mxu0 %v2375
        %v2462 = vpop.f32.mrb[0].mxu0
        %v2463 = vadd.f32 %v2395, %v2462
        %v2464 = vpop.f32.mrb[0].mxu0
        %2465 = vdwg.mxu0
        %v2466 = vadd.f32 %v2291, %v2463
        %v2467 = vsel %vm457, %v2466, 0.0
        %2468 = vadd.xlane.f32.xlu0 %v2467
        %v2469 = vpop.xlane.xlu0 %2468
        %v2470 = vmul.f32 %v2469, %v2271
        %v2471 = vsub.f32 %v2466, %v2470
        %v2472 = vmul.f32 %v2471, %v2471
        %v2473 = vsel %vm457, %v2472, 0.0
        %2474 = vadd.xlane.f32.xlu0 %v2473
        %v2475 = vpop.xlane.xlu0 %2474
        %v2476 = vmul.f32 %v2475, %v2271
        %v2477 = vadd.f32 %v2476, 1e-05
        %v2478 = vrsqrt.pop %v2477
        %v2479 = vmul.f32 %v2471, %v2478
        %v2480 = vlaneseq
        %v2481 = vshrl.u32 %v2480, 7
        %v2482 = vsub.s32 4, %v2481
        %v2483 = vrot.slane %v405, %v2482
        %v2484 = vmul.f32 %v2479, %v2483
        %v2485 = vlaneseq
        %v2486 = vshrl.u32 %v2485, 7
        %v2487 = vsub.s32 5, %v2486
        %v2488 = vrot.slane %v405, %v2487
        %v2489 = vadd.f32 %v2484, %v2488
        %2490 = vst.msk [vmem:[%s365] sm:$0xff] %vm457, %v2489
        %s2491 = sand.u32 %s223, 1
        %s2492 = scalar_lea.sflag [#allocation3], %s2491
        %s2493 = sand.u32 %s223, 1
        %s2494 = smul.addr %s2493, 8
        %s2495 = scalar_lea.vmem [#allocation2], %s2494
        // Predicated region
        $region53: #{tpu_custom_call.1} parent=47 // pred_check
          %p2496 = pneg %p233
        $region54: #{tpu_custom_call.1} parent=47 // pred_check_branch
          %2498 = sbr.rel (%p2496) target = $region56
        $region55: #{tpu_custom_call.1} parent=47 // pred_region
          %s2500 = ssub.s32 128, 128
          %2501 = vsyncadd %s2492, %s2500
          %s2502 = smul.addr %s25, 128
          %s2503 = scalar_lea.hbm %s7, %s2502
          %s2505 = sshll.u32 %s2495, 4
          %s2506 = int_to_ptr.vmem [resolvable:$true] %s2505
          %2508 = dma.vmem_to_hbm [thread:$0]  %s2506, 128, %s2503, %s2492
        $region56: #{tpu_custom_call.1} parent=47 // pred_fallthru
          _
      $region48: #{tpu_custom_call.1} parent=5 // pred_fallthru
        _
      %p2509 = scmp.le.s32.totalorder 2, %s16
      // Predicated region
      $region57: #{tpu_custom_call.1} parent=5 // pred_check
        %p2510 = pneg %p2509
      $region58: #{tpu_custom_call.1} parent=5 // pred_check_branch
        %2512 = sbr.rel (%p2510) target = $region60
      $region59: #{tpu_custom_call.1} parent=5 // pred_region
        %s2513 = ssub.s32 %s16, 2
        // Predicated region
        $region61: #{tpu_custom_call.1} parent=59 // pred_check
          %p2514 = pneg %p239
        $region62: #{tpu_custom_call.1} parent=59 // pred_check_branch
          %2516 = sbr.rel (%p2514) target = $region64
        $region63: #{tpu_custom_call.1} parent=59 // pred_region
          %s2517 = sand.u32 %s224, 1
          %s2518 = scalar_lea.sflag [#allocation3], %s2517
          %s2519 = sand.u32 %s224, 1
          %s2520 = smul.addr %s2519, 8
          %s2521 = scalar_lea.vmem [#allocation2], %s2520
          %2522 = dma.done %s2518, 128
        $region64: #{tpu_custom_call.1} parent=59 // pred_fallthru
          _
      $region60: #{tpu_custom_call.1} parent=5 // pred_fallthru
        _
    $region6: #{tpu_custom_call.1} parent=1 // loop_footer
      %s20 = sadd.s32 1, %s16
    $region7: #{tpu_custom_call.1} parent=1 // loop_footer_branch
      %15 = sbr.rel target = $region3
    $region8: #{tpu_custom_call.1} parent=1 // loop_exit
      _
    %2523 = vsyncpa [#allocation3], 1
    %s2524 = scalar_lea.sflag [#allocation3], 1
    %2525 = vsyncpa %s2524, 1

</llo_original>
